<compile_context>
chip_gen: v5e
topology: v5e:2x2
jax: 0.10.0
libtpu: 0.0.40
codegen_flags: <defaults>
</compile_context>

<pallas_src>
import jax
import jax.numpy as jnp
from jax.experimental import pallas as pl
from jax.experimental.pallas import tpu as pltpu


def freq_merge_kernel(x_ref, wt_ref, b_ref, out_ref):
    """Fused real+imag FreqMerging forward, single invocation (no grid).

    x_ref  : (2, 3, B, C) f32   stacked activations [real/imag, branch, B, C]
    wt_ref : (2, 3, C, C) bf16  pre-transposed 1x1-conv weights (y = x @ W^T)
    b_ref  : (2, 3, 1, C) f32   conv biases
    out_ref: (2, B, C)    f32   attention-merged feature per real/imag branch
    """
    for r in range(2):                       # real / imag, statically unrolled
        x0 = x_ref[r, 0]                     # (B, C) f32
        x1 = x_ref[r, 1]
        x2 = x_ref[r, 2]

        # 1x1 conv on (B, C, 1, 1) == linear layer; bf16 MXU, f32 accumulation.
        a0 = jnp.dot(x0.astype(jnp.bfloat16), wt_ref[r, 0],
                     preferred_element_type=jnp.float32) + b_ref[r, 0]
        a1 = jnp.dot(x1.astype(jnp.bfloat16), wt_ref[r, 1],
                     preferred_element_type=jnp.float32) + b_ref[r, 1]
        a2 = jnp.dot(x2.astype(jnp.bfloat16), wt_ref[r, 2],
                     preferred_element_type=jnp.float32) + b_ref[r, 2]

        # Softmax over the 3 branches (PyTorch dim=1 of the (B,3,C,1,1) view).
        m = jnp.maximum(jnp.maximum(a0, a1), a2)
        e0 = jnp.exp(a0 - m)
        e1 = jnp.exp(a1 - m)
        e2 = jnp.exp(a2 - m)
        inv_denom = pl.reciprocal(e0 + e1 + e2, approx=True)   # EUP slot

        # Weighted sum of the original (f32) branch features.
        out_ref[r] = (x0 * e0 + x1 * e1 + x2 * e2) * inv_denom


@jax.jit
def _freq_merging_forward(xr0, xr1, xr2, xi0, xi1, xi2, wt_all, b_all):
    """Fused real+imag forward.  Returns two (B, C, 1, 1) f32 arrays."""
    B, C = xr0.shape
    # One-time stack outside the kernel hot path (fused by XLA under jit).
    x_all = jnp.stack([jnp.stack([xr0, xr1, xr2]),
                       jnp.stack([xi0, xi1, xi2])])            # (2, 3, B, C)

    vmem = lambda: pl.BlockSpec(memory_space=pltpu.MemorySpace.VMEM)
    cost = pl.CostEstimate(
        flops=2 * 2 * 3 * B * C * C,                 # 6 matmuls, 2*B*C*C each
        transcendentals=2 * 3 * B * C,               # exp in the softmax
        bytes_accessed=(x_all.size * 4 + wt_all.size * 2 + b_all.size * 4
                        + 2 * B * C * 4),
    )

    out = pl.pallas_call(
        freq_merge_kernel,
        out_shape=jax.ShapeDtypeStruct((2, B, C), jnp.float32),
        in_specs=[vmem(), vmem(), vmem()],
        out_specs=vmem(),
        cost_estimate=cost,
    )(x_all, wt_all, b_all)
    return out[0].reshape(B, C, 1, 1), out[1].reshape(B, C, 1, 1)


class FreqMergingPallas:
    """JAX/Pallas port of the PyTorch FreqMerging module."""

    def __init__(self, in_channels=256, key=jax.random.PRNGKey(0)):
        self.dim = in_channels
        keys = jax.random.split(key, 12)
        scale = 1.0 / jnp.sqrt(in_channels)

        def mk_w(k):
            return jax.random.uniform(
                k, (in_channels, in_channels), jnp.float32, -scale, scale)

        def mk_b(k):
            return jax.random.uniform(
                k, (in_channels,), jnp.float32, -scale, scale)

        # Conv2d(C, C, kernel_size=1) weights squeezed to (C, C); f32 masters.
        self.real_w = jnp.stack([mk_w(keys[i]) for i in range(3)])      # (3,C,C)
        self.real_b = jnp.stack([mk_b(keys[3 + i]) for i in range(3)])  # (3,C)
        self.imag_w = jnp.stack([mk_w(keys[6 + i]) for i in range(3)])  # (3,C,C)
        self.imag_b = jnp.stack([mk_b(keys[9 + i]) for i in range(3)])  # (3,C)

        # Kernel-side params: pre-transposed (y = x @ W^T), real/imag stacked,
        # weights bf16 (halves the dominant HBM weight traffic), biases f32
        # shaped (2,3,1,C) for a clean sublane broadcast.
        self.wt_all = jnp.stack([
            jnp.transpose(self.real_w, (0, 2, 1)),
            jnp.transpose(self.imag_w, (0, 2, 1)),
        ]).astype(jnp.bfloat16)                                   # (2,3,C,C)
        self.b_all = jnp.stack([self.real_b, self.imag_b]
                               ).reshape(2, 3, 1, in_channels)    # (2,3,1,C)

    def __call__(self, lumi_feats_real, lumi_feats_imag):
        # Each list element: (B, C) (PyTorch feature before unsqueeze to (B,C,1,1)).
        xr0, xr1, xr2 = lumi_feats_real
        xi0, xi1, xi2 = lumi_feats_imag
        return _freq_merging_forward(xr0, xr1, xr2, xi0, xi1, xi2,
                                     self.wt_all, self.b_all)


def _reference(xs, wt_bf16, b):
    """Pure-JAX reference mirroring the PyTorch forward (bf16 weights)."""
    attn = jnp.stack([
        jnp.dot(xs[i].astype(jnp.bfloat16), wt_bf16[i],
                preferred_element_type=jnp.float32) + b[i, 0]
        for i in range(3)], axis=1)                       # (B, 3, C)
    p = jax.nn.softmax(attn, axis=1)
    x = jnp.stack(xs, axis=1)                             # (B, 3, C)
    return jnp.sum(x * p, axis=1)                         # (B, C)


if __name__ == "__main__":
    B, C = 2, 256  # the PyTorch module hard-codes 256-channel 1x1 convs
    key = jax.random.PRNGKey(0)
    k_mod, *k_in = jax.random.split(key, 7)

    module = FreqMergingPallas(in_channels=C, key=k_mod)

    lumi_feats_real = [jax.random.normal(k_in[i], (B, C), jnp.float32)
                       for i in range(3)]
    lumi_feats_imag = [jax.random.normal(k_in[3 + i], (B, C), jnp.float32)
                       for i in range(3)]

    out_real, out_imag = module(lumi_feats_real, lumi_feats_imag)
    jax.block_until_ready((out_real, out_imag))

    # Sanity check against a plain-JAX reference using the same bf16 weights.
    ref_real = _reference(lumi_feats_real, module.wt_all[0], module.b_all[0])
    ref_imag = _reference(lumi_feats_imag, module.wt_all[1], module.b_all[1])
    assert out_real.shape == (B, C, 1, 1) and out_imag.shape == (B, C, 1, 1)
    assert jnp.allclose(out_real.reshape(B, C), ref_real, atol=1e-2, rtol=1e-2)
    assert jnp.allclose(out_imag.reshape(B, C), ref_imag, atol=1e-2, rtol=1e-2)

    print("KERNEL_OK")
</pallas_src>

<mosaic_0001>
module attributes {stable_mosaic.version = 11 : i64} {
  func.func @freq_merge_kernel(%arg0: memref<2x3x2x256xf32, #tpu.memory_space<vmem>>, %arg1: memref<2x3x256x256xbf16, #tpu.memory_space<vmem>>, %arg2: memref<2x3x1x256xf32, #tpu.memory_space<vmem>>, %arg3: memref<2x2x256xf32, #tpu.memory_space<vmem>>) attributes {dimension_semantics = [], scalar_prefetch = 0 : i64, scratch_operands = 0 : i64, tpu.core_type = #tpu.core_type<tc>} {
    %c0 = arith.constant 0 : index
    %c0_0 = arith.constant 0 : index
    %c0_1 = arith.constant 0 : index
    %c0_2 = arith.constant 0 : index
    %0 = vector.load %arg0[%c0, %c0_0, %c0_1, %c0_2] : memref<2x3x2x256xf32, #tpu.memory_space<vmem>>, vector<1x1x2x256xf32>
    %1 = vector.shape_cast %0 : vector<1x1x2x256xf32> to vector<2x256xf32>
    %c0_3 = arith.constant 0 : index
    %c1 = arith.constant 1 : index
    %c0_4 = arith.constant 0 : index
    %c0_5 = arith.constant 0 : index
    %2 = vector.load %arg0[%c0_3, %c1, %c0_4, %c0_5] : memref<2x3x2x256xf32, #tpu.memory_space<vmem>>, vector<1x1x2x256xf32>
    %3 = vector.shape_cast %2 : vector<1x1x2x256xf32> to vector<2x256xf32>
    %c0_6 = arith.constant 0 : index
    %c2 = arith.constant 2 : index
    %c0_7 = arith.constant 0 : index
    %c0_8 = arith.constant 0 : index
    %4 = vector.load %arg0[%c0_6, %c2, %c0_7, %c0_8] : memref<2x3x2x256xf32, #tpu.memory_space<vmem>>, vector<1x1x2x256xf32>
    %5 = vector.shape_cast %4 : vector<1x1x2x256xf32> to vector<2x256xf32>
    %6 = arith.truncf %1 : vector<2x256xf32> to vector<2x256xbf16>
    %c0_9 = arith.constant 0 : index
    %c0_10 = arith.constant 0 : index
    %c0_11 = arith.constant 0 : index
    %c0_12 = arith.constant 0 : index
    %7 = vector.load %arg1[%c0_9, %c0_10, %c0_11, %c0_12] : memref<2x3x256x256xbf16, #tpu.memory_space<vmem>>, vector<1x1x256x256xbf16>
    %8 = vector.shape_cast %7 : vector<1x1x256x256xbf16> to vector<256x256xbf16>
    %cst = arith.constant dense<0.000000e+00> : vector<2x256xf32>
    %9 = tpu.matmul %6, %8, %cst {dimension_numbers = #tpu.dot_dimension_numbers<[1], [0], [0], [1], [0, 0, 1, 1], [], []>} : vector<2x256xbf16>, vector<256x256xbf16>, vector<2x256xf32> -> vector<2x256xf32>
    %c0_13 = arith.constant 0 : index
    %c0_14 = arith.constant 0 : index
    %c0_15 = arith.constant 0 : index
    %c0_16 = arith.constant 0 : index
    %10 = vector.load %arg2[%c0_13, %c0_14, %c0_15, %c0_16] : memref<2x3x1x256xf32, #tpu.memory_space<vmem>>, vector<1x1x1x256xf32>
    %11 = vector.shape_cast %10 : vector<1x1x1x256xf32> to vector<1x256xf32>
    %12 = vector.broadcast %11 : vector<1x256xf32> to vector<2x256xf32>
    %13 = arith.addf %9, %12 : vector<2x256xf32>
    %14 = arith.truncf %3 : vector<2x256xf32> to vector<2x256xbf16>
    %c0_17 = arith.constant 0 : index
    %c1_18 = arith.constant 1 : index
    %c0_19 = arith.constant 0 : index
    %c0_20 = arith.constant 0 : index
    %15 = vector.load %arg1[%c0_17, %c1_18, %c0_19, %c0_20] : memref<2x3x256x256xbf16, #tpu.memory_space<vmem>>, vector<1x1x256x256xbf16>
    %16 = vector.shape_cast %15 : vector<1x1x256x256xbf16> to vector<256x256xbf16>
    %cst_21 = arith.constant dense<0.000000e+00> : vector<2x256xf32>
    %17 = tpu.matmul %14, %16, %cst_21 {dimension_numbers = #tpu.dot_dimension_numbers<[1], [0], [0], [1], [0, 0, 1, 1], [], []>} : vector<2x256xbf16>, vector<256x256xbf16>, vector<2x256xf32> -> vector<2x256xf32>
    %c0_22 = arith.constant 0 : index
    %c1_23 = arith.constant 1 : index
    %c0_24 = arith.constant 0 : index
    %c0_25 = arith.constant 0 : index
    %18 = vector.load %arg2[%c0_22, %c1_23, %c0_24, %c0_25] : memref<2x3x1x256xf32, #tpu.memory_space<vmem>>, vector<1x1x1x256xf32>
    %19 = vector.shape_cast %18 : vector<1x1x1x256xf32> to vector<1x256xf32>
    %20 = vector.broadcast %19 : vector<1x256xf32> to vector<2x256xf32>
    %21 = arith.addf %17, %20 : vector<2x256xf32>
    %22 = arith.truncf %5 : vector<2x256xf32> to vector<2x256xbf16>
    %c0_26 = arith.constant 0 : index
    %c2_27 = arith.constant 2 : index
    %c0_28 = arith.constant 0 : index
    %c0_29 = arith.constant 0 : index
    %23 = vector.load %arg1[%c0_26, %c2_27, %c0_28, %c0_29] : memref<2x3x256x256xbf16, #tpu.memory_space<vmem>>, vector<1x1x256x256xbf16>
    %24 = vector.shape_cast %23 : vector<1x1x256x256xbf16> to vector<256x256xbf16>
    %cst_30 = arith.constant dense<0.000000e+00> : vector<2x256xf32>
    %25 = tpu.matmul %22, %24, %cst_30 {dimension_numbers = #tpu.dot_dimension_numbers<[1], [0], [0], [1], [0, 0, 1, 1], [], []>} : vector<2x256xbf16>, vector<256x256xbf16>, vector<2x256xf32> -> vector<2x256xf32>
    %c0_31 = arith.constant 0 : index
    %c2_32 = arith.constant 2 : index
    %c0_33 = arith.constant 0 : index
    %c0_34 = arith.constant 0 : index
    %26 = vector.load %arg2[%c0_31, %c2_32, %c0_33, %c0_34] : memref<2x3x1x256xf32, #tpu.memory_space<vmem>>, vector<1x1x1x256xf32>
    %27 = vector.shape_cast %26 : vector<1x1x1x256xf32> to vector<1x256xf32>
    %28 = vector.broadcast %27 : vector<1x256xf32> to vector<2x256xf32>
    %29 = arith.addf %25, %28 : vector<2x256xf32>
    %30 = arith.maximumf %13, %21 : vector<2x256xf32>
    %31 = arith.maximumf %30, %29 : vector<2x256xf32>
    %32 = arith.subf %13, %31 : vector<2x256xf32>
    %33 = math.exp %32 : vector<2x256xf32>
    %34 = arith.subf %21, %31 : vector<2x256xf32>
    %35 = math.exp %34 : vector<2x256xf32>
    %36 = arith.subf %29, %31 : vector<2x256xf32>
    %37 = math.exp %36 : vector<2x256xf32>
    %38 = arith.addf %33, %35 : vector<2x256xf32>
    %39 = arith.addf %38, %37 : vector<2x256xf32>
    %40 = tpu.reciprocal %39 {approx = true} : vector<2x256xf32> -> vector<2x256xf32>
    %41 = arith.mulf %1, %33 : vector<2x256xf32>
    %42 = arith.mulf %3, %35 : vector<2x256xf32>
    %43 = arith.addf %41, %42 : vector<2x256xf32>
    %44 = arith.mulf %5, %37 : vector<2x256xf32>
    %45 = arith.addf %43, %44 : vector<2x256xf32>
    %46 = arith.mulf %45, %40 : vector<2x256xf32>
    %c0_35 = arith.constant 0 : index
    %c0_36 = arith.constant 0 : index
    %c0_37 = arith.constant 0 : index
    %47 = vector.load %arg3[%c0_35, %c0_36, %c0_37] : memref<2x2x256xf32, #tpu.memory_space<vmem>>, vector<1x2x256xf32>
    %48 = vector.shape_cast %47 : vector<1x2x256xf32> to vector<2x256xf32>
    %49 = vector.shape_cast %46 : vector<2x256xf32> to vector<1x2x256xf32>
    tpu.vector_store %arg3[%c0_35, %c0_36, %c0_37], %49 {strides = array<i32>} : memref<2x2x256xf32, #tpu.memory_space<vmem>>, vector<1x2x256xf32>,
    %c1_38 = arith.constant 1 : index
    %c0_39 = arith.constant 0 : index
    %c0_40 = arith.constant 0 : index
    %c0_41 = arith.constant 0 : index
    %50 = vector.load %arg0[%c1_38, %c0_39, %c0_40, %c0_41] : memref<2x3x2x256xf32, #tpu.memory_space<vmem>>, vector<1x1x2x256xf32>
    %51 = vector.shape_cast %50 : vector<1x1x2x256xf32> to vector<2x256xf32>
    %c1_42 = arith.constant 1 : index
    %c1_43 = arith.constant 1 : index
    %c0_44 = arith.constant 0 : index
    %c0_45 = arith.constant 0 : index
    %52 = vector.load %arg0[%c1_42, %c1_43, %c0_44, %c0_45] : memref<2x3x2x256xf32, #tpu.memory_space<vmem>>, vector<1x1x2x256xf32>
    %53 = vector.shape_cast %52 : vector<1x1x2x256xf32> to vector<2x256xf32>
    %c1_46 = arith.constant 1 : index
    %c2_47 = arith.constant 2 : index
    %c0_48 = arith.constant 0 : index
    %c0_49 = arith.constant 0 : index
    %54 = vector.load %arg0[%c1_46, %c2_47, %c0_48, %c0_49] : memref<2x3x2x256xf32, #tpu.memory_space<vmem>>, vector<1x1x2x256xf32>
    %55 = vector.shape_cast %54 : vector<1x1x2x256xf32> to vector<2x256xf32>
    %56 = arith.truncf %51 : vector<2x256xf32> to vector<2x256xbf16>
    %c1_50 = arith.constant 1 : index
    %c0_51 = arith.constant 0 : index
    %c0_52 = arith.constant 0 : index
    %c0_53 = arith.constant 0 : index
    %57 = vector.load %arg1[%c1_50, %c0_51, %c0_52, %c0_53] : memref<2x3x256x256xbf16, #tpu.memory_space<vmem>>, vector<1x1x256x256xbf16>
    %58 = vector.shape_cast %57 : vector<1x1x256x256xbf16> to vector<256x256xbf16>
    %cst_54 = arith.constant dense<0.000000e+00> : vector<2x256xf32>
    %59 = tpu.matmul %56, %58, %cst_54 {dimension_numbers = #tpu.dot_dimension_numbers<[1], [0], [0], [1], [0, 0, 1, 1], [], []>} : vector<2x256xbf16>, vector<256x256xbf16>, vector<2x256xf32> -> vector<2x256xf32>
    %c1_55 = arith.constant 1 : index
    %c0_56 = arith.constant 0 : index
    %c0_57 = arith.constant 0 : index
    %c0_58 = arith.constant 0 : index
    %60 = vector.load %arg2[%c1_55, %c0_56, %c0_57, %c0_58] : memref<2x3x1x256xf32, #tpu.memory_space<vmem>>, vector<1x1x1x256xf32>
    %61 = vector.shape_cast %60 : vector<1x1x1x256xf32> to vector<1x256xf32>
    %62 = vector.broadcast %61 : vector<1x256xf32> to vector<2x256xf32>
    %63 = arith.addf %59, %62 : vector<2x256xf32>
    %64 = arith.truncf %53 : vector<2x256xf32> to vector<2x256xbf16>
    %c1_59 = arith.constant 1 : index
    %c1_60 = arith.constant 1 : index
    %c0_61 = arith.constant 0 : index
    %c0_62 = arith.constant 0 : index
    %65 = vector.load %arg1[%c1_59, %c1_60, %c0_61, %c0_62] : memref<2x3x256x256xbf16, #tpu.memory_space<vmem>>, vector<1x1x256x256xbf16>
    %66 = vector.shape_cast %65 : vector<1x1x256x256xbf16> to vector<256x256xbf16>
    %cst_63 = arith.constant dense<0.000000e+00> : vector<2x256xf32>
    %67 = tpu.matmul %64, %66, %cst_63 {dimension_numbers = #tpu.dot_dimension_numbers<[1], [0], [0], [1], [0, 0, 1, 1], [], []>} : vector<2x256xbf16>, vector<256x256xbf16>, vector<2x256xf32> -> vector<2x256xf32>
    %c1_64 = arith.constant 1 : index
    %c1_65 = arith.constant 1 : index
    %c0_66 = arith.constant 0 : index
    %c0_67 = arith.constant 0 : index
    %68 = vector.load %arg2[%c1_64, %c1_65, %c0_66, %c0_67] : memref<2x3x1x256xf32, #tpu.memory_space<vmem>>, vector<1x1x1x256xf32>
    %69 = vector.shape_cast %68 : vector<1x1x1x256xf32> to vector<1x256xf32>
    %70 = vector.broadcast %69 : vector<1x256xf32> to vector<2x256xf32>
    %71 = arith.addf %67, %70 : vector<2x256xf32>
    %72 = arith.truncf %55 : vector<2x256xf32> to vector<2x256xbf16>
    %c1_68 = arith.constant 1 : index
    %c2_69 = arith.constant 2 : index
    %c0_70 = arith.constant 0 : index
    %c0_71 = arith.constant 0 : index
    %73 = vector.load %arg1[%c1_68, %c2_69, %c0_70, %c0_71] : memref<2x3x256x256xbf16, #tpu.memory_space<vmem>>, vector<1x1x256x256xbf16>
    %74 = vector.shape_cast %73 : vector<1x1x256x256xbf16> to vector<256x256xbf16>
    %cst_72 = arith.constant dense<0.000000e+00> : vector<2x256xf32>
    %75 = tpu.matmul %72, %74, %cst_72 {dimension_numbers = #tpu.dot_dimension_numbers<[1], [0], [0], [1], [0, 0, 1, 1], [], []>} : vector<2x256xbf16>, vector<256x256xbf16>, vector<2x256xf32> -> vector<2x256xf32>
    %c1_73 = arith.constant 1 : index
    %c2_74 = arith.constant 2 : index
    %c0_75 = arith.constant 0 : index
    %c0_76 = arith.constant 0 : index
    %76 = vector.load %arg2[%c1_73, %c2_74, %c0_75, %c0_76] : memref<2x3x1x256xf32, #tpu.memory_space<vmem>>, vector<1x1x1x256xf32>
    %77 = vector.shape_cast %76 : vector<1x1x1x256xf32> to vector<1x256xf32>
    %78 = vector.broadcast %77 : vector<1x256xf32> to vector<2x256xf32>
    %79 = arith.addf %75, %78 : vector<2x256xf32>
    %80 = arith.maximumf %63, %71 : vector<2x256xf32>
    %81 = arith.maximumf %80, %79 : vector<2x256xf32>
    %82 = arith.subf %63, %81 : vector<2x256xf32>
    %83 = math.exp %82 : vector<2x256xf32>
    %84 = arith.subf %71, %81 : vector<2x256xf32>
    %85 = math.exp %84 : vector<2x256xf32>
    %86 = arith.subf %79, %81 : vector<2x256xf32>
    %87 = math.exp %86 : vector<2x256xf32>
    %88 = arith.addf %83, %85 : vector<2x256xf32>
    %89 = arith.addf %88, %87 : vector<2x256xf32>
    %90 = tpu.reciprocal %89 {approx = true} : vector<2x256xf32> -> vector<2x256xf32>
    %91 = arith.mulf %51, %83 : vector<2x256xf32>
    %92 = arith.mulf %53, %85 : vector<2x256xf32>
    %93 = arith.addf %91, %92 : vector<2x256xf32>
    %94 = arith.mulf %55, %87 : vector<2x256xf32>
    %95 = arith.addf %93, %94 : vector<2x256xf32>
    %96 = arith.mulf %95, %90 : vector<2x256xf32>
    %c1_77 = arith.constant 1 : index
    %c0_78 = arith.constant 0 : index
    %c0_79 = arith.constant 0 : index
    %97 = vector.load %arg3[%c1_77, %c0_78, %c0_79] : memref<2x2x256xf32, #tpu.memory_space<vmem>>, vector<1x2x256xf32>
    %98 = vector.shape_cast %97 : vector<1x2x256xf32> to vector<2x256xf32>
    %99 = vector.shape_cast %96 : vector<2x256xf32> to vector<1x2x256xf32>
    tpu.vector_store %arg3[%c1_77, %c0_78, %c0_79], %99 {strides = array<i32>} : memref<2x2x256xf32, #tpu.memory_space<vmem>>, vector<1x2x256xf32>,
    return
  }
}

</mosaic_0001>

<llo_original>
// kernel: _freq_merging_forward.1
$region0: #{_freq_merging_forward.1}
  #allocation0 [shape = 'u32[]', space=smem, size = 0x4, offset = 0x4, fixed_abs, tag = 'smem constant byte address 0x4 - core index']
  #allocation1 [shape = 'u32[72,128]{1,0:T(1,128)}', space=vmem, size = 0x9000, scoped, tag = 'internal scratch']
  %s0 = inlined_call_operand.vmem [shape: f32[2,3,2,256], index: 0, kind: input, shape index: {}]
  %s1 = inlined_call_operand.hbm [shape: bf16[2,3,256,256], index: 1, kind: input, shape index: {}]
  %s2 = inlined_call_operand.vmem [shape: f32[2,3,1,256], index: 2, kind: input, shape index: {}]
  %s3 = inlined_call_operand.vmem [shape: f32[2,2,256], index: 3, kind: output, shape index: {}]
  %s4 = sld [smem:[#allocation0]]
  $region26: #{_freq_merging_forward.1} parent=0
    _
  %s6 = ssub.s32 1, %s4
  %s7 = scalar_select 0, %s6, %s4
  $region1: #{_freq_merging_forward.1} parent=0
    #allocation2 [shape = 'u8[786432]{0}', space=vmem, size = 0xc0000, scoped, tag = 'input window, operand 1, single buffered']
    #allocation3 [shape = 's32[1]{0}', space=sflag, size = 0x4, scoped, tag = 'scoped memory for _freq_merging_forward.1']
    %8 = vsyncpa [#allocation3], 0
    // Predicated region
    $region2: #{_freq_merging_forward.1} parent=1 // pred_check
      _
    $region3: #{_freq_merging_forward.1} parent=1 // pred_check_branch
      %10 = sbr.rel (0) target = $region5
    $region4: #{_freq_merging_forward.1} parent=1 // pred_region
      _
    $region5: #{_freq_merging_forward.1} parent=1 // pred_fallthru
      _
    // Predicated region
    $region6: #{_freq_merging_forward.1} parent=1 // pred_check
      _
    $region7: #{_freq_merging_forward.1} parent=1 // pred_check_branch
      %12 = sbr.rel (0) target = $region9
    $region8: #{_freq_merging_forward.1} parent=1 // pred_region
      %14 = vsyncadd [#allocation3], 0
      %s15 = sshll.u32 %s1, 4
      %s16 = int_to_ptr.hbm [resolvable:$true] %s15
      %s17 = sshll.u32 [#allocation2], 4
      %s18 = int_to_ptr.vmem [resolvable:$true] %s17
      %23 = dma.hbm_to_vmem [thread:$0]  %s16, 24576, %s18, [#allocation3], 128, 128, 8
    $region9: #{_freq_merging_forward.1} parent=1 // pred_fallthru
      _
    // Predicated region
    $region10: #{_freq_merging_forward.1} parent=1 // pred_check
      _
    $region11: #{_freq_merging_forward.1} parent=1 // pred_check_branch
      %25 = sbr.rel (0) target = $region13
    $region12: #{_freq_merging_forward.1} parent=1 // pred_region
      _
    $region13: #{_freq_merging_forward.1} parent=1 // pred_fallthru
      _
    // Predicated region
    $region14: #{_freq_merging_forward.1} parent=1 // pred_check
      _
    $region15: #{_freq_merging_forward.1} parent=1 // pred_check_branch
      %27 = sbr.rel (0) target = $region17
    $region16: #{_freq_merging_forward.1} parent=1 // pred_region
      %29 = dma.done [#allocation3], 24576
    $region17: #{_freq_merging_forward.1} parent=1 // pred_fallthru
      _
    %v30 = vld [vmem:[%s0] sm:$0xf]
    %s31 = scalar_lea.vmem %s0, 4
    %v32 = vld [vmem:[%s31] sm:$0xf]
    %s33 = scalar_lea.vmem %s0, 8
    %v34 = vld [vmem:[%s33] sm:$0xf]
    %36 = vst [vmem:[#allocation1] ss:$4 sm:$0xff] %v30
    %v37 = vld.sshfl [vmem:[#allocation1] sm:$0xff pattern:$0x73625140]
    %v38 = vld.sshfl [vmem:[#allocation1 + $0x8] sm:$0xff pattern:$0x73625140]
    %v41 = vpack.c.bf16 %v37, %v37
    %v42 = vpack.c.bf16 %v38, %v38
    %v43 = vld [vmem:[#allocation2] sm:$0xff]
    %v44 = vld [vmem:[#allocation2 + $0x8] sm:$0xff]
    %v45 = vld [vmem:[#allocation2 + $0x10] sm:$0xff]
    %v46 = vld [vmem:[#allocation2 + $0x18] sm:$0xff]
    %v47 = vld [vmem:[#allocation2 + $0x20] sm:$0xff]
    %v48 = vld [vmem:[#allocation2 + $0x28] sm:$0xff]
    %v49 = vld [vmem:[#allocation2 + $0x30] sm:$0xff]
    %v50 = vld [vmem:[#allocation2 + $0x38] sm:$0xff]
    %v51 = vld [vmem:[#allocation2 + $0x40] sm:$0xff]
    %v52 = vld [vmem:[#allocation2 + $0x48] sm:$0xff]
    %v53 = vld [vmem:[#allocation2 + $0x50] sm:$0xff]
    %v54 = vld [vmem:[#allocation2 + $0x58] sm:$0xff]
    %v55 = vld [vmem:[#allocation2 + $0x60] sm:$0xff]
    %v56 = vld [vmem:[#allocation2 + $0x68] sm:$0xff]
    %v57 = vld [vmem:[#allocation2 + $0x70] sm:$0xff]
    %v58 = vld [vmem:[#allocation2 + $0x78] sm:$0xff]
    %v59 = vld [vmem:[#allocation2 + $0x80] sm:$0xff]
    %v60 = vld [vmem:[#allocation2 + $0x88] sm:$0xff]
    %v61 = vld [vmem:[#allocation2 + $0x90] sm:$0xff]
    %v62 = vld [vmem:[#allocation2 + $0x98] sm:$0xff]
    %v63 = vld [vmem:[#allocation2 + $0xa0] sm:$0xff]
    %v64 = vld [vmem:[#allocation2 + $0xa8] sm:$0xff]
    %v65 = vld [vmem:[#allocation2 + $0xb0] sm:$0xff]
    %v66 = vld [vmem:[#allocation2 + $0xb8] sm:$0xff]
    %v67 = vld [vmem:[#allocation2 + $0xc0] sm:$0xff]
    %v68 = vld [vmem:[#allocation2 + $0xc8] sm:$0xff]
    %v69 = vld [vmem:[#allocation2 + $0xd0] sm:$0xff]
    %v70 = vld [vmem:[#allocation2 + $0xd8] sm:$0xff]
    %v71 = vld [vmem:[#allocation2 + $0xe0] sm:$0xff]
    %v72 = vld [vmem:[#allocation2 + $0xe8] sm:$0xff]
    %v73 = vld [vmem:[#allocation2 + $0xf0] sm:$0xff]
    %v74 = vld [vmem:[#allocation2 + $0xf8] sm:$0xff]
    %v75 = vld [vmem:[%s2] sm:$0x3]
    %v77 = vperm.slane %v75, 0
    %v78 = vperm.slane %v75, 1
    %v113 = vunpack.c.l.b16 %v43
    %v114 = vunpack.c.h.b16 %v43
    %v115 = vunpack.c.l.b16 %v44
    %v116 = vunpack.c.h.b16 %v44
    %v117 = vunpack.c.l.b16 %v45
    %v118 = vunpack.c.h.b16 %v45
    %v119 = vunpack.c.l.b16 %v46
    %v120 = vunpack.c.h.b16 %v46
    %v121 = vunpack.c.l.b16 %v47
    %v122 = vunpack.c.h.b16 %v47
    %v123 = vunpack.c.l.b16 %v48
    %v124 = vunpack.c.h.b16 %v48
    %v125 = vunpack.c.l.b16 %v49
    %v126 = vunpack.c.h.b16 %v49
    %v127 = vunpack.c.l.b16 %v50
    %v128 = vunpack.c.h.b16 %v50
    %v129 = vunpack.c.l.b16 %v51
    %v130 = vunpack.c.h.b16 %v51
    %v131 = vunpack.c.l.b16 %v52
    %v132 = vunpack.c.h.b16 %v52
    %v133 = vunpack.c.l.b16 %v53
    %v134 = vunpack.c.h.b16 %v53
    %v135 = vunpack.c.l.b16 %v54
    %v136 = vunpack.c.h.b16 %v54
    %v137 = vunpack.c.l.b16 %v55
    %v138 = vunpack.c.h.b16 %v55
    %v139 = vunpack.c.l.b16 %v56
    %v140 = vunpack.c.h.b16 %v56
    %v141 = vunpack.c.l.b16 %v57
    %v142 = vunpack.c.h.b16 %v57
    %v143 = vunpack.c.l.b16 %v58
    %v144 = vunpack.c.h.b16 %v58
    %v145 = vunpack.c.l.b16 %v59
    %v146 = vunpack.c.h.b16 %v59
    %v147 = vunpack.c.l.b16 %v60
    %v148 = vunpack.c.h.b16 %v60
    %v149 = vunpack.c.l.b16 %v61
    %v150 = vunpack.c.h.b16 %v61
    %v151 = vunpack.c.l.b16 %v62
    %v152 = vunpack.c.h.b16 %v62
    %v153 = vunpack.c.l.b16 %v63
    %v154 = vunpack.c.h.b16 %v63
    %v155 = vunpack.c.l.b16 %v64
    %v156 = vunpack.c.h.b16 %v64
    %v157 = vunpack.c.l.b16 %v65
    %v158 = vunpack.c.h.b16 %v65
    %v159 = vunpack.c.l.b16 %v66
    %v160 = vunpack.c.h.b16 %v66
    %v161 = vunpack.c.l.b16 %v67
    %v162 = vunpack.c.h.b16 %v67
    %v163 = vunpack.c.l.b16 %v68
    %v164 = vunpack.c.h.b16 %v68
    %v165 = vunpack.c.l.b16 %v69
    %v166 = vunpack.c.h.b16 %v69
    %v167 = vunpack.c.l.b16 %v70
    %v168 = vunpack.c.h.b16 %v70
    %v169 = vunpack.c.l.b16 %v71
    %v170 = vunpack.c.h.b16 %v71
    %v171 = vunpack.c.l.b16 %v72
    %v172 = vunpack.c.h.b16 %v72
    %v173 = vunpack.c.l.b16 %v73
    %v174 = vunpack.c.h.b16 %v73
    %v175 = vunpack.c.l.b16 %v74
    %v176 = vunpack.c.h.b16 %v74
    %v177 = vpack.c.b16 %v115, %v113
    %v178 = vpack.c.b16 %v116, %v114
    %v179 = vpack.c.b16 %v119, %v117
    %v180 = vpack.c.b16 %v120, %v118
    %v181 = vpack.c.b16 %v123, %v121
    %v182 = vpack.c.b16 %v124, %v122
    %v183 = vpack.c.b16 %v127, %v125
    %v184 = vpack.c.b16 %v128, %v126
    %v185 = vpack.c.b16 %v131, %v129
    %v186 = vpack.c.b16 %v132, %v130
    %v187 = vpack.c.b16 %v135, %v133
    %v188 = vpack.c.b16 %v136, %v134
    %v189 = vpack.c.b16 %v139, %v137
    %v190 = vpack.c.b16 %v140, %v138
    %v191 = vpack.c.b16 %v143, %v141
    %v192 = vpack.c.b16 %v144, %v142
    %v193 = vpack.c.b16 %v147, %v145
    %v194 = vpack.c.b16 %v148, %v146
    %v195 = vpack.c.b16 %v151, %v149
    %v196 = vpack.c.b16 %v152, %v150
    %v197 = vpack.c.b16 %v155, %v153
    %v198 = vpack.c.b16 %v156, %v154
    %v199 = vpack.c.b16 %v159, %v157
    %v200 = vpack.c.b16 %v160, %v158
    %v201 = vpack.c.b16 %v163, %v161
    %v202 = vpack.c.b16 %v164, %v162
    %v203 = vpack.c.b16 %v167, %v165
    %v204 = vpack.c.b16 %v168, %v166
    %v205 = vpack.c.b16 %v171, %v169
    %v206 = vpack.c.b16 %v172, %v170
    %v207 = vpack.c.b16 %v175, %v173
    %v208 = vpack.c.b16 %v176, %v174
    %241 = vmatpush.bf16.msra.mxu0 %v191
    %242 = vmatpush.bf16.msra.mxu0 %v189
    %243 = vmatpush.bf16.msra.mxu0 %v187
    %244 = vmatpush.bf16.msra.mxu0 %v185
    %245 = vmatpush.bf16.msra.mxu0 %v183
    %246 = vmatpush.bf16.msra.mxu0 %v181
    %247 = vmatpush.bf16.msra.mxu0 %v179
    %248 = vmatpush.bf16.msra.mxu0 %v177
    %249 = vmatmul.bf16.gmra.mxu0 %v41
    %v250 = vpop.f32.mrf.mxu0
    %v251 = vadd.f32 %v77, %v250
    %v252 = vpop.f32.mrf.mxu0
    %253 = vdwg.mxu0
    %254 = vmatpush.bf16.msra.mxu0 %v207
    %255 = vmatpush.bf16.msra.mxu0 %v205
    %256 = vmatpush.bf16.msra.mxu0 %v203
    %257 = vmatpush.bf16.msra.mxu0 %v201
    %258 = vmatpush.bf16.msra.mxu0 %v199
    %259 = vmatpush.bf16.msra.mxu0 %v197
    %260 = vmatpush.bf16.msra.mxu0 %v195
    %261 = vmatpush.bf16.msra.mxu0 %v193
    %262 = vmatmul.bf16.gmra.mxu0 %v42
    %v263 = vpop.f32.mrf.mxu0
    %v264 = vadd.f32 %v251, %v263
    %v265 = vpop.f32.mrf.mxu0
    %266 = vdwg.mxu0
    %267 = vmatpush.bf16.msra.mxu0 %v192
    %268 = vmatpush.bf16.msra.mxu0 %v190
    %269 = vmatpush.bf16.msra.mxu0 %v188
    %270 = vmatpush.bf16.msra.mxu0 %v186
    %271 = vmatpush.bf16.msra.mxu0 %v184
    %272 = vmatpush.bf16.msra.mxu0 %v182
    %273 = vmatpush.bf16.msra.mxu0 %v180
    %274 = vmatpush.bf16.msra.mxu0 %v178
    %275 = vmatmul.bf16.gmra.mxu0 %v41
    %v276 = vpop.f32.mrf.mxu0
    %v277 = vadd.f32 %v78, %v276
    %v278 = vpop.f32.mrf.mxu0
    %279 = vdwg.mxu0
    %280 = vmatpush.bf16.msra.mxu0 %v208
    %281 = vmatpush.bf16.msra.mxu0 %v206
    %282 = vmatpush.bf16.msra.mxu0 %v204
    %283 = vmatpush.bf16.msra.mxu0 %v202
    %284 = vmatpush.bf16.msra.mxu0 %v200
    %285 = vmatpush.bf16.msra.mxu0 %v198
    %286 = vmatpush.bf16.msra.mxu0 %v196
    %287 = vmatpush.bf16.msra.mxu0 %v194
    %288 = vmatmul.bf16.gmra.mxu0 %v42
    %v289 = vpop.f32.mrf.mxu0
    %v290 = vadd.f32 %v277, %v289
    %v291 = vpop.f32.mrf.mxu0
    %292 = vdwg.mxu0
    %294 = vst [vmem:[#allocation1] ss:$4 sm:$0xff] %v32
    %v295 = vld.sshfl [vmem:[#allocation1] sm:$0xff pattern:$0x73625140]
    %v296 = vld.sshfl [vmem:[#allocation1 + $0x8] sm:$0xff pattern:$0x73625140]
    %v299 = vpack.c.bf16 %v295, %v295
    %v300 = vpack.c.bf16 %v296, %v296
    %s301 = scalar_lea.vmem [#allocation2], 256
    %v302 = vld [vmem:[%s301] sm:$0xff]
    %v303 = vld [vmem:[%s301 + $0x8] sm:$0xff]
    %v304 = vld [vmem:[%s301 + $0x10] sm:$0xff]
    %v305 = vld [vmem:[%s301 + $0x18] sm:$0xff]
    %v306 = vld [vmem:[%s301 + $0x20] sm:$0xff]
    %v307 = vld [vmem:[%s301 + $0x28] sm:$0xff]
    %v308 = vld [vmem:[%s301 + $0x30] sm:$0xff]
    %v309 = vld [vmem:[%s301 + $0x38] sm:$0xff]
    %v310 = vld [vmem:[%s301 + $0x40] sm:$0xff]
    %v311 = vld [vmem:[%s301 + $0x48] sm:$0xff]
    %v312 = vld [vmem:[%s301 + $0x50] sm:$0xff]
    %v313 = vld [vmem:[%s301 + $0x58] sm:$0xff]
    %v314 = vld [vmem:[%s301 + $0x60] sm:$0xff]
    %v315 = vld [vmem:[%s301 + $0x68] sm:$0xff]
    %v316 = vld [vmem:[%s301 + $0x70] sm:$0xff]
    %v317 = vld [vmem:[%s301 + $0x78] sm:$0xff]
    %v318 = vld [vmem:[%s301 + $0x80] sm:$0xff]
    %v319 = vld [vmem:[%s301 + $0x88] sm:$0xff]
    %v320 = vld [vmem:[%s301 + $0x90] sm:$0xff]
    %v321 = vld [vmem:[%s301 + $0x98] sm:$0xff]
    %v322 = vld [vmem:[%s301 + $0xa0] sm:$0xff]
    %v323 = vld [vmem:[%s301 + $0xa8] sm:$0xff]
    %v324 = vld [vmem:[%s301 + $0xb0] sm:$0xff]
    %v325 = vld [vmem:[%s301 + $0xb8] sm:$0xff]
    %v326 = vld [vmem:[%s301 + $0xc0] sm:$0xff]
    %v327 = vld [vmem:[%s301 + $0xc8] sm:$0xff]
    %v328 = vld [vmem:[%s301 + $0xd0] sm:$0xff]
    %v329 = vld [vmem:[%s301 + $0xd8] sm:$0xff]
    %v330 = vld [vmem:[%s301 + $0xe0] sm:$0xff]
    %v331 = vld [vmem:[%s301 + $0xe8] sm:$0xff]
    %v332 = vld [vmem:[%s301 + $0xf0] sm:$0xff]
    %v333 = vld [vmem:[%s301 + $0xf8] sm:$0xff]
    %s334 = scalar_lea.vmem %s2, 2
    %v335 = vld [vmem:[%s334] sm:$0x3]
    %v337 = vperm.slane %v335, 0
    %v338 = vperm.slane %v335, 1
    %v373 = vunpack.c.l.b16 %v302
    %v374 = vunpack.c.h.b16 %v302
    %v375 = vunpack.c.l.b16 %v303
    %v376 = vunpack.c.h.b16 %v303
    %v377 = vunpack.c.l.b16 %v304
    %v378 = vunpack.c.h.b16 %v304
    %v379 = vunpack.c.l.b16 %v305
    %v380 = vunpack.c.h.b16 %v305
    %v381 = vunpack.c.l.b16 %v306
    %v382 = vunpack.c.h.b16 %v306
    %v383 = vunpack.c.l.b16 %v307
    %v384 = vunpack.c.h.b16 %v307
    %v385 = vunpack.c.l.b16 %v308
    %v386 = vunpack.c.h.b16 %v308
    %v387 = vunpack.c.l.b16 %v309
    %v388 = vunpack.c.h.b16 %v309
    %v389 = vunpack.c.l.b16 %v310
    %v390 = vunpack.c.h.b16 %v310
    %v391 = vunpack.c.l.b16 %v311
    %v392 = vunpack.c.h.b16 %v311
    %v393 = vunpack.c.l.b16 %v312
    %v394 = vunpack.c.h.b16 %v312
    %v395 = vunpack.c.l.b16 %v313
    %v396 = vunpack.c.h.b16 %v313
    %v397 = vunpack.c.l.b16 %v314
    %v398 = vunpack.c.h.b16 %v314
    %v399 = vunpack.c.l.b16 %v315
    %v400 = vunpack.c.h.b16 %v315
    %v401 = vunpack.c.l.b16 %v316
    %v402 = vunpack.c.h.b16 %v316
    %v403 = vunpack.c.l.b16 %v317
    %v404 = vunpack.c.h.b16 %v317
    %v405 = vunpack.c.l.b16 %v318
    %v406 = vunpack.c.h.b16 %v318
    %v407 = vunpack.c.l.b16 %v319
    %v408 = vunpack.c.h.b16 %v319
    %v409 = vunpack.c.l.b16 %v320
    %v410 = vunpack.c.h.b16 %v320
    %v411 = vunpack.c.l.b16 %v321
    %v412 = vunpack.c.h.b16 %v321
    %v413 = vunpack.c.l.b16 %v322
    %v414 = vunpack.c.h.b16 %v322
    %v415 = vunpack.c.l.b16 %v323
    %v416 = vunpack.c.h.b16 %v323
    %v417 = vunpack.c.l.b16 %v324
    %v418 = vunpack.c.h.b16 %v324
    %v419 = vunpack.c.l.b16 %v325
    %v420 = vunpack.c.h.b16 %v325
    %v421 = vunpack.c.l.b16 %v326
    %v422 = vunpack.c.h.b16 %v326
    %v423 = vunpack.c.l.b16 %v327
    %v424 = vunpack.c.h.b16 %v327
    %v425 = vunpack.c.l.b16 %v328
    %v426 = vunpack.c.h.b16 %v328
    %v427 = vunpack.c.l.b16 %v329
    %v428 = vunpack.c.h.b16 %v329
    %v429 = vunpack.c.l.b16 %v330
    %v430 = vunpack.c.h.b16 %v330
    %v431 = vunpack.c.l.b16 %v331
    %v432 = vunpack.c.h.b16 %v331
    %v433 = vunpack.c.l.b16 %v332
    %v434 = vunpack.c.h.b16 %v332
    %v435 = vunpack.c.l.b16 %v333
    %v436 = vunpack.c.h.b16 %v333
    %v437 = vpack.c.b16 %v375, %v373
    %v438 = vpack.c.b16 %v376, %v374
    %v439 = vpack.c.b16 %v379, %v377
    %v440 = vpack.c.b16 %v380, %v378
    %v441 = vpack.c.b16 %v383, %v381
    %v442 = vpack.c.b16 %v384, %v382
    %v443 = vpack.c.b16 %v387, %v385
    %v444 = vpack.c.b16 %v388, %v386
    %v445 = vpack.c.b16 %v391, %v389
    %v446 = vpack.c.b16 %v392, %v390
    %v447 = vpack.c.b16 %v395, %v393
    %v448 = vpack.c.b16 %v396, %v394
    %v449 = vpack.c.b16 %v399, %v397
    %v450 = vpack.c.b16 %v400, %v398
    %v451 = vpack.c.b16 %v403, %v401
    %v452 = vpack.c.b16 %v404, %v402
    %v453 = vpack.c.b16 %v407, %v405
    %v454 = vpack.c.b16 %v408, %v406
    %v455 = vpack.c.b16 %v411, %v409
    %v456 = vpack.c.b16 %v412, %v410
    %v457 = vpack.c.b16 %v415, %v413
    %v458 = vpack.c.b16 %v416, %v414
    %v459 = vpack.c.b16 %v419, %v417
    %v460 = vpack.c.b16 %v420, %v418
    %v461 = vpack.c.b16 %v423, %v421
    %v462 = vpack.c.b16 %v424, %v422
    %v463 = vpack.c.b16 %v427, %v425
    %v464 = vpack.c.b16 %v428, %v426
    %v465 = vpack.c.b16 %v431, %v429
    %v466 = vpack.c.b16 %v432, %v430
    %v467 = vpack.c.b16 %v435, %v433
    %v468 = vpack.c.b16 %v436, %v434
    %501 = vmatpush.bf16.msra.mxu0 %v451
    %502 = vmatpush.bf16.msra.mxu0 %v449
    %503 = vmatpush.bf16.msra.mxu0 %v447
    %504 = vmatpush.bf16.msra.mxu0 %v445
    %505 = vmatpush.bf16.msra.mxu0 %v443
    %506 = vmatpush.bf16.msra.mxu0 %v441
    %507 = vmatpush.bf16.msra.mxu0 %v439
    %508 = vmatpush.bf16.msra.mxu0 %v437
    %509 = vmatmul.bf16.gmra.mxu0 %v299
    %v510 = vpop.f32.mrf.mxu0
    %v511 = vadd.f32 %v337, %v510
    %v512 = vpop.f32.mrf.mxu0
    %513 = vdwg.mxu0
    %514 = vmatpush.bf16.msra.mxu0 %v467
    %515 = vmatpush.bf16.msra.mxu0 %v465
    %516 = vmatpush.bf16.msra.mxu0 %v463
    %517 = vmatpush.bf16.msra.mxu0 %v461
    %518 = vmatpush.bf16.msra.mxu0 %v459
    %519 = vmatpush.bf16.msra.mxu0 %v457
    %520 = vmatpush.bf16.msra.mxu0 %v455
    %521 = vmatpush.bf16.msra.mxu0 %v453
    %522 = vmatmul.bf16.gmra.mxu0 %v300
    %v523 = vpop.f32.mrf.mxu0
    %v524 = vadd.f32 %v511, %v523
    %v525 = vpop.f32.mrf.mxu0
    %526 = vdwg.mxu0
    %527 = vmatpush.bf16.msra.mxu0 %v452
    %528 = vmatpush.bf16.msra.mxu0 %v450
    %529 = vmatpush.bf16.msra.mxu0 %v448
    %530 = vmatpush.bf16.msra.mxu0 %v446
    %531 = vmatpush.bf16.msra.mxu0 %v444
    %532 = vmatpush.bf16.msra.mxu0 %v442
    %533 = vmatpush.bf16.msra.mxu0 %v440
    %534 = vmatpush.bf16.msra.mxu0 %v438
    %535 = vmatmul.bf16.gmra.mxu0 %v299
    %v536 = vpop.f32.mrf.mxu0
    %v537 = vadd.f32 %v338, %v536
    %v538 = vpop.f32.mrf.mxu0
    %539 = vdwg.mxu0
    %540 = vmatpush.bf16.msra.mxu0 %v468
    %541 = vmatpush.bf16.msra.mxu0 %v466
    %542 = vmatpush.bf16.msra.mxu0 %v464
    %543 = vmatpush.bf16.msra.mxu0 %v462
    %544 = vmatpush.bf16.msra.mxu0 %v460
    %545 = vmatpush.bf16.msra.mxu0 %v458
    %546 = vmatpush.bf16.msra.mxu0 %v456
    %547 = vmatpush.bf16.msra.mxu0 %v454
    %548 = vmatmul.bf16.gmra.mxu0 %v300
    %v549 = vpop.f32.mrf.mxu0
    %v550 = vadd.f32 %v537, %v549
    %v551 = vpop.f32.mrf.mxu0
    %552 = vdwg.mxu0
    %554 = vst [vmem:[#allocation1] ss:$4 sm:$0xff] %v34
    %v555 = vld.sshfl [vmem:[#allocation1] sm:$0xff pattern:$0x73625140]
    %v556 = vld.sshfl [vmem:[#allocation1 + $0x8] sm:$0xff pattern:$0x73625140]
    %v559 = vpack.c.bf16 %v555, %v555
    %v560 = vpack.c.bf16 %v556, %v556
    %s561 = scalar_lea.vmem [#allocation2], 512
    %v562 = vld [vmem:[%s561] sm:$0xff]
    %v563 = vld [vmem:[%s561 + $0x8] sm:$0xff]
    %v564 = vld [vmem:[%s561 + $0x10] sm:$0xff]
    %v565 = vld [vmem:[%s561 + $0x18] sm:$0xff]
    %v566 = vld [vmem:[%s561 + $0x20] sm:$0xff]
    %v567 = vld [vmem:[%s561 + $0x28] sm:$0xff]
    %v568 = vld [vmem:[%s561 + $0x30] sm:$0xff]
    %v569 = vld [vmem:[%s561 + $0x38] sm:$0xff]
    %v570 = vld [vmem:[%s561 + $0x40] sm:$0xff]
    %v571 = vld [vmem:[%s561 + $0x48] sm:$0xff]
    %v572 = vld [vmem:[%s561 + $0x50] sm:$0xff]
    %v573 = vld [vmem:[%s561 + $0x58] sm:$0xff]
    %v574 = vld [vmem:[%s561 + $0x60] sm:$0xff]
    %v575 = vld [vmem:[%s561 + $0x68] sm:$0xff]
    %v576 = vld [vmem:[%s561 + $0x70] sm:$0xff]
    %v577 = vld [vmem:[%s561 + $0x78] sm:$0xff]
    %v578 = vld [vmem:[%s561 + $0x80] sm:$0xff]
    %v579 = vld [vmem:[%s561 + $0x88] sm:$0xff]
    %v580 = vld [vmem:[%s561 + $0x90] sm:$0xff]
    %v581 = vld [vmem:[%s561 + $0x98] sm:$0xff]
    %v582 = vld [vmem:[%s561 + $0xa0] sm:$0xff]
    %v583 = vld [vmem:[%s561 + $0xa8] sm:$0xff]
    %v584 = vld [vmem:[%s561 + $0xb0] sm:$0xff]
    %v585 = vld [vmem:[%s561 + $0xb8] sm:$0xff]
    %v586 = vld [vmem:[%s561 + $0xc0] sm:$0xff]
    %v587 = vld [vmem:[%s561 + $0xc8] sm:$0xff]
    %v588 = vld [vmem:[%s561 + $0xd0] sm:$0xff]
    %v589 = vld [vmem:[%s561 + $0xd8] sm:$0xff]
    %v590 = vld [vmem:[%s561 + $0xe0] sm:$0xff]
    %v591 = vld [vmem:[%s561 + $0xe8] sm:$0xff]
    %v592 = vld [vmem:[%s561 + $0xf0] sm:$0xff]
    %v593 = vld [vmem:[%s561 + $0xf8] sm:$0xff]
    %s594 = scalar_lea.vmem %s2, 4
    %v595 = vld [vmem:[%s594] sm:$0x3]
    %v597 = vperm.slane %v595, 0
    %v598 = vperm.slane %v595, 1
    %v633 = vunpack.c.l.b16 %v562
    %v634 = vunpack.c.h.b16 %v562
    %v635 = vunpack.c.l.b16 %v563
    %v636 = vunpack.c.h.b16 %v563
    %v637 = vunpack.c.l.b16 %v564
    %v638 = vunpack.c.h.b16 %v564
    %v639 = vunpack.c.l.b16 %v565
    %v640 = vunpack.c.h.b16 %v565
    %v641 = vunpack.c.l.b16 %v566
    %v642 = vunpack.c.h.b16 %v566
    %v643 = vunpack.c.l.b16 %v567
    %v644 = vunpack.c.h.b16 %v567
    %v645 = vunpack.c.l.b16 %v568
    %v646 = vunpack.c.h.b16 %v568
    %v647 = vunpack.c.l.b16 %v569
    %v648 = vunpack.c.h.b16 %v569
    %v649 = vunpack.c.l.b16 %v570
    %v650 = vunpack.c.h.b16 %v570
    %v651 = vunpack.c.l.b16 %v571
    %v652 = vunpack.c.h.b16 %v571
    %v653 = vunpack.c.l.b16 %v572
    %v654 = vunpack.c.h.b16 %v572
    %v655 = vunpack.c.l.b16 %v573
    %v656 = vunpack.c.h.b16 %v573
    %v657 = vunpack.c.l.b16 %v574
    %v658 = vunpack.c.h.b16 %v574
    %v659 = vunpack.c.l.b16 %v575
    %v660 = vunpack.c.h.b16 %v575
    %v661 = vunpack.c.l.b16 %v576
    %v662 = vunpack.c.h.b16 %v576
    %v663 = vunpack.c.l.b16 %v577
    %v664 = vunpack.c.h.b16 %v577
    %v665 = vunpack.c.l.b16 %v578
    %v666 = vunpack.c.h.b16 %v578
    %v667 = vunpack.c.l.b16 %v579
    %v668 = vunpack.c.h.b16 %v579
    %v669 = vunpack.c.l.b16 %v580
    %v670 = vunpack.c.h.b16 %v580
    %v671 = vunpack.c.l.b16 %v581
    %v672 = vunpack.c.h.b16 %v581
    %v673 = vunpack.c.l.b16 %v582
    %v674 = vunpack.c.h.b16 %v582
    %v675 = vunpack.c.l.b16 %v583
    %v676 = vunpack.c.h.b16 %v583
    %v677 = vunpack.c.l.b16 %v584
    %v678 = vunpack.c.h.b16 %v584
    %v679 = vunpack.c.l.b16 %v585
    %v680 = vunpack.c.h.b16 %v585
    %v681 = vunpack.c.l.b16 %v586
    %v682 = vunpack.c.h.b16 %v586
    %v683 = vunpack.c.l.b16 %v587
    %v684 = vunpack.c.h.b16 %v587
    %v685 = vunpack.c.l.b16 %v588
    %v686 = vunpack.c.h.b16 %v588
    %v687 = vunpack.c.l.b16 %v589
    %v688 = vunpack.c.h.b16 %v589
    %v689 = vunpack.c.l.b16 %v590
    %v690 = vunpack.c.h.b16 %v590
    %v691 = vunpack.c.l.b16 %v591
    %v692 = vunpack.c.h.b16 %v591
    %v693 = vunpack.c.l.b16 %v592
    %v694 = vunpack.c.h.b16 %v592
    %v695 = vunpack.c.l.b16 %v593
    %v696 = vunpack.c.h.b16 %v593
    %v697 = vpack.c.b16 %v635, %v633
    %v698 = vpack.c.b16 %v636, %v634
    %v699 = vpack.c.b16 %v639, %v637
    %v700 = vpack.c.b16 %v640, %v638
    %v701 = vpack.c.b16 %v643, %v641
    %v702 = vpack.c.b16 %v644, %v642
    %v703 = vpack.c.b16 %v647, %v645
    %v704 = vpack.c.b16 %v648, %v646
    %v705 = vpack.c.b16 %v651, %v649
    %v706 = vpack.c.b16 %v652, %v650
    %v707 = vpack.c.b16 %v655, %v653
    %v708 = vpack.c.b16 %v656, %v654
    %v709 = vpack.c.b16 %v659, %v657
    %v710 = vpack.c.b16 %v660, %v658
    %v711 = vpack.c.b16 %v663, %v661
    %v712 = vpack.c.b16 %v664, %v662
    %v713 = vpack.c.b16 %v667, %v665
    %v714 = vpack.c.b16 %v668, %v666
    %v715 = vpack.c.b16 %v671, %v669
    %v716 = vpack.c.b16 %v672, %v670
    %v717 = vpack.c.b16 %v675, %v673
    %v718 = vpack.c.b16 %v676, %v674
    %v719 = vpack.c.b16 %v679, %v677
    %v720 = vpack.c.b16 %v680, %v678
    %v721 = vpack.c.b16 %v683, %v681
    %v722 = vpack.c.b16 %v684, %v682
    %v723 = vpack.c.b16 %v687, %v685
    %v724 = vpack.c.b16 %v688, %v686
    %v725 = vpack.c.b16 %v691, %v689
    %v726 = vpack.c.b16 %v692, %v690
    %v727 = vpack.c.b16 %v695, %v693
    %v728 = vpack.c.b16 %v696, %v694
    %761 = vmatpush.bf16.msra.mxu0 %v711
    %762 = vmatpush.bf16.msra.mxu0 %v709
    %763 = vmatpush.bf16.msra.mxu0 %v707
    %764 = vmatpush.bf16.msra.mxu0 %v705
    %765 = vmatpush.bf16.msra.mxu0 %v703
    %766 = vmatpush.bf16.msra.mxu0 %v701
    %767 = vmatpush.bf16.msra.mxu0 %v699
    %768 = vmatpush.bf16.msra.mxu0 %v697
    %769 = vmatmul.bf16.gmra.mxu0 %v559
    %v770 = vpop.f32.mrf.mxu0
    %v771 = vadd.f32 %v597, %v770
    %v772 = vpop.f32.mrf.mxu0
    %773 = vdwg.mxu0
    %774 = vmatpush.bf16.msra.mxu0 %v727
    %775 = vmatpush.bf16.msra.mxu0 %v725
    %776 = vmatpush.bf16.msra.mxu0 %v723
    %777 = vmatpush.bf16.msra.mxu0 %v721
    %778 = vmatpush.bf16.msra.mxu0 %v719
    %779 = vmatpush.bf16.msra.mxu0 %v717
    %780 = vmatpush.bf16.msra.mxu0 %v715
    %781 = vmatpush.bf16.msra.mxu0 %v713
    %782 = vmatmul.bf16.gmra.mxu0 %v560
    %v783 = vpop.f32.mrf.mxu0
    %v784 = vadd.f32 %v771, %v783
    %v785 = vpop.f32.mrf.mxu0
    %786 = vdwg.mxu0
    %787 = vmatpush.bf16.msra.mxu0 %v712
    %788 = vmatpush.bf16.msra.mxu0 %v710
    %789 = vmatpush.bf16.msra.mxu0 %v708
    %790 = vmatpush.bf16.msra.mxu0 %v706
    %791 = vmatpush.bf16.msra.mxu0 %v704
    %792 = vmatpush.bf16.msra.mxu0 %v702
    %793 = vmatpush.bf16.msra.mxu0 %v700
    %794 = vmatpush.bf16.msra.mxu0 %v698
    %795 = vmatmul.bf16.gmra.mxu0 %v559
    %v796 = vpop.f32.mrf.mxu0
    %v797 = vadd.f32 %v598, %v796
    %v798 = vpop.f32.mrf.mxu0
    %799 = vdwg.mxu0
    %800 = vmatpush.bf16.msra.mxu0 %v728
    %801 = vmatpush.bf16.msra.mxu0 %v726
    %802 = vmatpush.bf16.msra.mxu0 %v724
    %803 = vmatpush.bf16.msra.mxu0 %v722
    %804 = vmatpush.bf16.msra.mxu0 %v720
    %805 = vmatpush.bf16.msra.mxu0 %v718
    %806 = vmatpush.bf16.msra.mxu0 %v716
    %807 = vmatpush.bf16.msra.mxu0 %v714
    %808 = vmatmul.bf16.gmra.mxu0 %v560
    %v809 = vpop.f32.mrf.mxu0
    %v810 = vadd.f32 %v797, %v809
    %v811 = vpop.f32.mrf.mxu0
    %812 = vdwg.mxu0
    %v813 = vmax.f32 %v264, %v524
    %v814 = vmax.f32 %v290, %v550
    %v815 = vmax.f32 %v813, %v784
    %v816 = vmax.f32 %v814, %v810
    %v817 = vsub.f32 %v264, %v815
    %v818 = vsub.f32 %v290, %v816
    %v819 = vmul.f32 %v817, 1.442695
    %v820 = vpow.pop %v819
    %v821 = vmul.f32 %v818, 1.442695
    %v822 = vpow.pop %v821
    %v823 = vsub.f32 %v524, %v815
    %v824 = vsub.f32 %v550, %v816
    %v825 = vmul.f32 %v823, 1.442695
    %v826 = vpow.pop %v825
    %v827 = vmul.f32 %v824, 1.442695
    %v828 = vpow.pop %v827
    %v829 = vsub.f32 %v784, %v815
    %v830 = vsub.f32 %v810, %v816
    %v831 = vmul.f32 %v829, 1.442695
    %v832 = vpow.pop %v831
    %v833 = vmul.f32 %v830, 1.442695
    %v834 = vpow.pop %v833
    %v835 = vadd.f32 %v820, %v826
    %v836 = vadd.f32 %v822, %v828
    %v837 = vadd.f32 %v835, %v832
    %v838 = vadd.f32 %v836, %v834
    %v839 = vrcp.pop %v837
    %v840 = vrcp.pop %v838
    %v843 = vrot.slane %v822, 6
    %vm844 = vcmask 1041408
    %v845 = vsel %vm844, %v820, %v843
    %v847 = vmul.f32 %v30, %v845
    %v850 = vrot.slane %v828, 6
    %v851 = vsel %vm844, %v826, %v850
    %v853 = vmul.f32 %v32, %v851
    %v854 = vadd.f32 %v847, %v853
    %v857 = vrot.slane %v834, 6
    %v858 = vsel %vm844, %v832, %v857
    %v860 = vmul.f32 %v34, %v858
    %v861 = vadd.f32 %v854, %v860
    %v864 = vrot.slane %v840, 6
    %v865 = vsel %vm844, %v839, %v864
    %v867 = vmul.f32 %v861, %v865
    %868 = vst [vmem:[%s3] sm:$0xf] %v867
    %s869 = scalar_lea.vmem %s0, 12
    %v870 = vld [vmem:[%s869] sm:$0xf]
    %s871 = scalar_lea.vmem %s0, 16
    %v872 = vld [vmem:[%s871] sm:$0xf]
    %s873 = scalar_lea.vmem %s0, 20
    %v874 = vld [vmem:[%s873] sm:$0xf]
    %876 = vst [vmem:[#allocation1] ss:$4 sm:$0xff] %v870
    %v877 = vld.sshfl [vmem:[#allocation1] sm:$0xff pattern:$0x73625140]
    %v878 = vld.sshfl [vmem:[#allocation1 + $0x8] sm:$0xff pattern:$0x73625140]
    %v881 = vpack.c.bf16 %v877, %v877
    %v882 = vpack.c.bf16 %v878, %v878
    %s883 = scalar_lea.vmem [#allocation2], 768
    %v884 = vld [vmem:[%s883] sm:$0xff]
    %v885 = vld [vmem:[%s883 + $0x8] sm:$0xff]
    %v886 = vld [vmem:[%s883 + $0x10] sm:$0xff]
    %v887 = vld [vmem:[%s883 + $0x18] sm:$0xff]
    %v888 = vld [vmem:[%s883 + $0x20] sm:$0xff]
    %v889 = vld [vmem:[%s883 + $0x28] sm:$0xff]
    %v890 = vld [vmem:[%s883 + $0x30] sm:$0xff]
    %v891 = vld [vmem:[%s883 + $0x38] sm:$0xff]
    %v892 = vld [vmem:[%s883 + $0x40] sm:$0xff]
    %v893 = vld [vmem:[%s883 + $0x48] sm:$0xff]
    %v894 = vld [vmem:[%s883 + $0x50] sm:$0xff]
    %v895 = vld [vmem:[%s883 + $0x58] sm:$0xff]
    %v896 = vld [vmem:[%s883 + $0x60] sm:$0xff]
    %v897 = vld [vmem:[%s883 + $0x68] sm:$0xff]
    %v898 = vld [vmem:[%s883 + $0x70] sm:$0xff]
    %v899 = vld [vmem:[%s883 + $0x78] sm:$0xff]
    %v900 = vld [vmem:[%s883 + $0x80] sm:$0xff]
    %v901 = vld [vmem:[%s883 + $0x88] sm:$0xff]
    %v902 = vld [vmem:[%s883 + $0x90] sm:$0xff]
    %v903 = vld [vmem:[%s883 + $0x98] sm:$0xff]
    %v904 = vld [vmem:[%s883 + $0xa0] sm:$0xff]
    %v905 = vld [vmem:[%s883 + $0xa8] sm:$0xff]
    %v906 = vld [vmem:[%s883 + $0xb0] sm:$0xff]
    %v907 = vld [vmem:[%s883 + $0xb8] sm:$0xff]
    %v908 = vld [vmem:[%s883 + $0xc0] sm:$0xff]
    %v909 = vld [vmem:[%s883 + $0xc8] sm:$0xff]
    %v910 = vld [vmem:[%s883 + $0xd0] sm:$0xff]
    %v911 = vld [vmem:[%s883 + $0xd8] sm:$0xff]
    %v912 = vld [vmem:[%s883 + $0xe0] sm:$0xff]
    %v913 = vld [vmem:[%s883 + $0xe8] sm:$0xff]
    %v914 = vld [vmem:[%s883 + $0xf0] sm:$0xff]
    %v915 = vld [vmem:[%s883 + $0xf8] sm:$0xff]
    %s916 = scalar_lea.vmem %s2, 6
    %v917 = vld [vmem:[%s916] sm:$0x3]
    %v919 = vperm.slane %v917, 0
    %v920 = vperm.slane %v917, 1
    %v955 = vunpack.c.l.b16 %v884
    %v956 = vunpack.c.h.b16 %v884
    %v957 = vunpack.c.l.b16 %v885
    %v958 = vunpack.c.h.b16 %v885
    %v959 = vunpack.c.l.b16 %v886
    %v960 = vunpack.c.h.b16 %v886
    %v961 = vunpack.c.l.b16 %v887
    %v962 = vunpack.c.h.b16 %v887
    %v963 = vunpack.c.l.b16 %v888
    %v964 = vunpack.c.h.b16 %v888
    %v965 = vunpack.c.l.b16 %v889
    %v966 = vunpack.c.h.b16 %v889
    %v967 = vunpack.c.l.b16 %v890
    %v968 = vunpack.c.h.b16 %v890
    %v969 = vunpack.c.l.b16 %v891
    %v970 = vunpack.c.h.b16 %v891
    %v971 = vunpack.c.l.b16 %v892
    %v972 = vunpack.c.h.b16 %v892
    %v973 = vunpack.c.l.b16 %v893
    %v974 = vunpack.c.h.b16 %v893
    %v975 = vunpack.c.l.b16 %v894
    %v976 = vunpack.c.h.b16 %v894
    %v977 = vunpack.c.l.b16 %v895
    %v978 = vunpack.c.h.b16 %v895
    %v979 = vunpack.c.l.b16 %v896
    %v980 = vunpack.c.h.b16 %v896
    %v981 = vunpack.c.l.b16 %v897
    %v982 = vunpack.c.h.b16 %v897
    %v983 = vunpack.c.l.b16 %v898
    %v984 = vunpack.c.h.b16 %v898
    %v985 = vunpack.c.l.b16 %v899
    %v986 = vunpack.c.h.b16 %v899
    %v987 = vunpack.c.l.b16 %v900
    %v988 = vunpack.c.h.b16 %v900
    %v989 = vunpack.c.l.b16 %v901
    %v990 = vunpack.c.h.b16 %v901
    %v991 = vunpack.c.l.b16 %v902
    %v992 = vunpack.c.h.b16 %v902
    %v993 = vunpack.c.l.b16 %v903
    %v994 = vunpack.c.h.b16 %v903
    %v995 = vunpack.c.l.b16 %v904
    %v996 = vunpack.c.h.b16 %v904
    %v997 = vunpack.c.l.b16 %v905
    %v998 = vunpack.c.h.b16 %v905
    %v999 = vunpack.c.l.b16 %v906
    %v1000 = vunpack.c.h.b16 %v906
    %v1001 = vunpack.c.l.b16 %v907
    %v1002 = vunpack.c.h.b16 %v907
    %v1003 = vunpack.c.l.b16 %v908
    %v1004 = vunpack.c.h.b16 %v908
    %v1005 = vunpack.c.l.b16 %v909
    %v1006 = vunpack.c.h.b16 %v909
    %v1007 = vunpack.c.l.b16 %v910
    %v1008 = vunpack.c.h.b16 %v910
    %v1009 = vunpack.c.l.b16 %v911
    %v1010 = vunpack.c.h.b16 %v911
    %v1011 = vunpack.c.l.b16 %v912
    %v1012 = vunpack.c.h.b16 %v912
    %v1013 = vunpack.c.l.b16 %v913
    %v1014 = vunpack.c.h.b16 %v913
    %v1015 = vunpack.c.l.b16 %v914
    %v1016 = vunpack.c.h.b16 %v914
    %v1017 = vunpack.c.l.b16 %v915
    %v1018 = vunpack.c.h.b16 %v915
    %v1019 = vpack.c.b16 %v957, %v955
    %v1020 = vpack.c.b16 %v958, %v956
    %v1021 = vpack.c.b16 %v961, %v959
    %v1022 = vpack.c.b16 %v962, %v960
    %v1023 = vpack.c.b16 %v965, %v963
    %v1024 = vpack.c.b16 %v966, %v964
    %v1025 = vpack.c.b16 %v969, %v967
    %v1026 = vpack.c.b16 %v970, %v968
    %v1027 = vpack.c.b16 %v973, %v971
    %v1028 = vpack.c.b16 %v974, %v972
    %v1029 = vpack.c.b16 %v977, %v975
    %v1030 = vpack.c.b16 %v978, %v976
    %v1031 = vpack.c.b16 %v981, %v979
    %v1032 = vpack.c.b16 %v982, %v980
    %v1033 = vpack.c.b16 %v985, %v983
    %v1034 = vpack.c.b16 %v986, %v984
    %v1035 = vpack.c.b16 %v989, %v987
    %v1036 = vpack.c.b16 %v990, %v988
    %v1037 = vpack.c.b16 %v993, %v991
    %v1038 = vpack.c.b16 %v994, %v992
    %v1039 = vpack.c.b16 %v997, %v995
    %v1040 = vpack.c.b16 %v998, %v996
    %v1041 = vpack.c.b16 %v1001, %v999
    %v1042 = vpack.c.b16 %v1002, %v1000
    %v1043 = vpack.c.b16 %v1005, %v1003
    %v1044 = vpack.c.b16 %v1006, %v1004
    %v1045 = vpack.c.b16 %v1009, %v1007
    %v1046 = vpack.c.b16 %v1010, %v1008
    %v1047 = vpack.c.b16 %v1013, %v1011
    %v1048 = vpack.c.b16 %v1014, %v1012
    %v1049 = vpack.c.b16 %v1017, %v1015
    %v1050 = vpack.c.b16 %v1018, %v1016
    %1083 = vmatpush.bf16.msra.mxu0 %v1033
    %1084 = vmatpush.bf16.msra.mxu0 %v1031
    %1085 = vmatpush.bf16.msra.mxu0 %v1029
    %1086 = vmatpush.bf16.msra.mxu0 %v1027
    %1087 = vmatpush.bf16.msra.mxu0 %v1025
    %1088 = vmatpush.bf16.msra.mxu0 %v1023
    %1089 = vmatpush.bf16.msra.mxu0 %v1021
    %1090 = vmatpush.bf16.msra.mxu0 %v1019
    %1091 = vmatmul.bf16.gmra.mxu0 %v881
    %v1092 = vpop.f32.mrf.mxu0
    %v1093 = vadd.f32 %v919, %v1092
    %v1094 = vpop.f32.mrf.mxu0
    %1095 = vdwg.mxu0
    %1096 = vmatpush.bf16.msra.mxu0 %v1049
    %1097 = vmatpush.bf16.msra.mxu0 %v1047
    %1098 = vmatpush.bf16.msra.mxu0 %v1045
    %1099 = vmatpush.bf16.msra.mxu0 %v1043
    %1100 = vmatpush.bf16.msra.mxu0 %v1041
    %1101 = vmatpush.bf16.msra.mxu0 %v1039
    %1102 = vmatpush.bf16.msra.mxu0 %v1037
    %1103 = vmatpush.bf16.msra.mxu0 %v1035
    %1104 = vmatmul.bf16.gmra.mxu0 %v882
    %v1105 = vpop.f32.mrf.mxu0
    %v1106 = vadd.f32 %v1093, %v1105
    %v1107 = vpop.f32.mrf.mxu0
    %1108 = vdwg.mxu0
    %1109 = vmatpush.bf16.msra.mxu0 %v1034
    %1110 = vmatpush.bf16.msra.mxu0 %v1032
    %1111 = vmatpush.bf16.msra.mxu0 %v1030
    %1112 = vmatpush.bf16.msra.mxu0 %v1028
    %1113 = vmatpush.bf16.msra.mxu0 %v1026
    %1114 = vmatpush.bf16.msra.mxu0 %v1024
    %1115 = vmatpush.bf16.msra.mxu0 %v1022
    %1116 = vmatpush.bf16.msra.mxu0 %v1020
    %1117 = vmatmul.bf16.gmra.mxu0 %v881
    %v1118 = vpop.f32.mrf.mxu0
    %v1119 = vadd.f32 %v920, %v1118
    %v1120 = vpop.f32.mrf.mxu0
    %1121 = vdwg.mxu0
    %1122 = vmatpush.bf16.msra.mxu0 %v1050
    %1123 = vmatpush.bf16.msra.mxu0 %v1048
    %1124 = vmatpush.bf16.msra.mxu0 %v1046
    %1125 = vmatpush.bf16.msra.mxu0 %v1044
    %1126 = vmatpush.bf16.msra.mxu0 %v1042
    %1127 = vmatpush.bf16.msra.mxu0 %v1040
    %1128 = vmatpush.bf16.msra.mxu0 %v1038
    %1129 = vmatpush.bf16.msra.mxu0 %v1036
    %1130 = vmatmul.bf16.gmra.mxu0 %v882
    %v1131 = vpop.f32.mrf.mxu0
    %v1132 = vadd.f32 %v1119, %v1131
    %v1133 = vpop.f32.mrf.mxu0
    %1134 = vdwg.mxu0
    %1136 = vst [vmem:[#allocation1] ss:$4 sm:$0xff] %v872
    %v1137 = vld.sshfl [vmem:[#allocation1] sm:$0xff pattern:$0x73625140]
    %v1138 = vld.sshfl [vmem:[#allocation1 + $0x8] sm:$0xff pattern:$0x73625140]
    %v1141 = vpack.c.bf16 %v1137, %v1137
    %v1142 = vpack.c.bf16 %v1138, %v1138
    %s1143 = scalar_lea.vmem [#allocation2], 1024
    %v1144 = vld [vmem:[%s1143] sm:$0xff]
    %v1145 = vld [vmem:[%s1143 + $0x8] sm:$0xff]
    %v1146 = vld [vmem:[%s1143 + $0x10] sm:$0xff]
    %v1147 = vld [vmem:[%s1143 + $0x18] sm:$0xff]
    %v1148 = vld [vmem:[%s1143 + $0x20] sm:$0xff]
    %v1149 = vld [vmem:[%s1143 + $0x28] sm:$0xff]
    %v1150 = vld [vmem:[%s1143 + $0x30] sm:$0xff]
    %v1151 = vld [vmem:[%s1143 + $0x38] sm:$0xff]
    %v1152 = vld [vmem:[%s1143 + $0x40] sm:$0xff]
    %v1153 = vld [vmem:[%s1143 + $0x48] sm:$0xff]
    %v1154 = vld [vmem:[%s1143 + $0x50] sm:$0xff]
    %v1155 = vld [vmem:[%s1143 + $0x58] sm:$0xff]
    %v1156 = vld [vmem:[%s1143 + $0x60] sm:$0xff]
    %v1157 = vld [vmem:[%s1143 + $0x68] sm:$0xff]
    %v1158 = vld [vmem:[%s1143 + $0x70] sm:$0xff]
    %v1159 = vld [vmem:[%s1143 + $0x78] sm:$0xff]
    %v1160 = vld [vmem:[%s1143 + $0x80] sm:$0xff]
    %v1161 = vld [vmem:[%s1143 + $0x88] sm:$0xff]
    %v1162 = vld [vmem:[%s1143 + $0x90] sm:$0xff]
    %v1163 = vld [vmem:[%s1143 + $0x98] sm:$0xff]
    %v1164 = vld [vmem:[%s1143 + $0xa0] sm:$0xff]
    %v1165 = vld [vmem:[%s1143 + $0xa8] sm:$0xff]
    %v1166 = vld [vmem:[%s1143 + $0xb0] sm:$0xff]
    %v1167 = vld [vmem:[%s1143 + $0xb8] sm:$0xff]
    %v1168 = vld [vmem:[%s1143 + $0xc0] sm:$0xff]
    %v1169 = vld [vmem:[%s1143 + $0xc8] sm:$0xff]
    %v1170 = vld [vmem:[%s1143 + $0xd0] sm:$0xff]
    %v1171 = vld [vmem:[%s1143 + $0xd8] sm:$0xff]
    %v1172 = vld [vmem:[%s1143 + $0xe0] sm:$0xff]
    %v1173 = vld [vmem:[%s1143 + $0xe8] sm:$0xff]
    %v1174 = vld [vmem:[%s1143 + $0xf0] sm:$0xff]
    %v1175 = vld [vmem:[%s1143 + $0xf8] sm:$0xff]
    %s1176 = scalar_lea.vmem %s2, 8
    %v1177 = vld [vmem:[%s1176] sm:$0x3]
    %v1179 = vperm.slane %v1177, 0
    %v1180 = vperm.slane %v1177, 1
    %v1215 = vunpack.c.l.b16 %v1144
    %v1216 = vunpack.c.h.b16 %v1144
    %v1217 = vunpack.c.l.b16 %v1145
    %v1218 = vunpack.c.h.b16 %v1145
    %v1219 = vunpack.c.l.b16 %v1146
    %v1220 = vunpack.c.h.b16 %v1146
    %v1221 = vunpack.c.l.b16 %v1147
    %v1222 = vunpack.c.h.b16 %v1147
    %v1223 = vunpack.c.l.b16 %v1148
    %v1224 = vunpack.c.h.b16 %v1148
    %v1225 = vunpack.c.l.b16 %v1149
    %v1226 = vunpack.c.h.b16 %v1149
    %v1227 = vunpack.c.l.b16 %v1150
    %v1228 = vunpack.c.h.b16 %v1150
    %v1229 = vunpack.c.l.b16 %v1151
    %v1230 = vunpack.c.h.b16 %v1151
    %v1231 = vunpack.c.l.b16 %v1152
    %v1232 = vunpack.c.h.b16 %v1152
    %v1233 = vunpack.c.l.b16 %v1153
    %v1234 = vunpack.c.h.b16 %v1153
    %v1235 = vunpack.c.l.b16 %v1154
    %v1236 = vunpack.c.h.b16 %v1154
    %v1237 = vunpack.c.l.b16 %v1155
    %v1238 = vunpack.c.h.b16 %v1155
    %v1239 = vunpack.c.l.b16 %v1156
    %v1240 = vunpack.c.h.b16 %v1156
    %v1241 = vunpack.c.l.b16 %v1157
    %v1242 = vunpack.c.h.b16 %v1157
    %v1243 = vunpack.c.l.b16 %v1158
    %v1244 = vunpack.c.h.b16 %v1158
    %v1245 = vunpack.c.l.b16 %v1159
    %v1246 = vunpack.c.h.b16 %v1159
    %v1247 = vunpack.c.l.b16 %v1160
    %v1248 = vunpack.c.h.b16 %v1160
    %v1249 = vunpack.c.l.b16 %v1161
    %v1250 = vunpack.c.h.b16 %v1161
    %v1251 = vunpack.c.l.b16 %v1162
    %v1252 = vunpack.c.h.b16 %v1162
    %v1253 = vunpack.c.l.b16 %v1163
    %v1254 = vunpack.c.h.b16 %v1163
    %v1255 = vunpack.c.l.b16 %v1164
    %v1256 = vunpack.c.h.b16 %v1164
    %v1257 = vunpack.c.l.b16 %v1165
    %v1258 = vunpack.c.h.b16 %v1165
    %v1259 = vunpack.c.l.b16 %v1166
    %v1260 = vunpack.c.h.b16 %v1166
    %v1261 = vunpack.c.l.b16 %v1167
    %v1262 = vunpack.c.h.b16 %v1167
    %v1263 = vunpack.c.l.b16 %v1168
    %v1264 = vunpack.c.h.b16 %v1168
    %v1265 = vunpack.c.l.b16 %v1169
    %v1266 = vunpack.c.h.b16 %v1169
    %v1267 = vunpack.c.l.b16 %v1170
    %v1268 = vunpack.c.h.b16 %v1170
    %v1269 = vunpack.c.l.b16 %v1171
    %v1270 = vunpack.c.h.b16 %v1171
    %v1271 = vunpack.c.l.b16 %v1172
    %v1272 = vunpack.c.h.b16 %v1172
    %v1273 = vunpack.c.l.b16 %v1173
    %v1274 = vunpack.c.h.b16 %v1173
    %v1275 = vunpack.c.l.b16 %v1174
    %v1276 = vunpack.c.h.b16 %v1174
    %v1277 = vunpack.c.l.b16 %v1175
    %v1278 = vunpack.c.h.b16 %v1175
    %v1279 = vpack.c.b16 %v1217, %v1215
    %v1280 = vpack.c.b16 %v1218, %v1216
    %v1281 = vpack.c.b16 %v1221, %v1219
    %v1282 = vpack.c.b16 %v1222, %v1220
    %v1283 = vpack.c.b16 %v1225, %v1223
    %v1284 = vpack.c.b16 %v1226, %v1224
    %v1285 = vpack.c.b16 %v1229, %v1227
    %v1286 = vpack.c.b16 %v1230, %v1228
    %v1287 = vpack.c.b16 %v1233, %v1231
    %v1288 = vpack.c.b16 %v1234, %v1232
    %v1289 = vpack.c.b16 %v1237, %v1235
    %v1290 = vpack.c.b16 %v1238, %v1236
    %v1291 = vpack.c.b16 %v1241, %v1239
    %v1292 = vpack.c.b16 %v1242, %v1240
    %v1293 = vpack.c.b16 %v1245, %v1243
    %v1294 = vpack.c.b16 %v1246, %v1244
    %v1295 = vpack.c.b16 %v1249, %v1247
    %v1296 = vpack.c.b16 %v1250, %v1248
    %v1297 = vpack.c.b16 %v1253, %v1251
    %v1298 = vpack.c.b16 %v1254, %v1252
    %v1299 = vpack.c.b16 %v1257, %v1255
    %v1300 = vpack.c.b16 %v1258, %v1256
    %v1301 = vpack.c.b16 %v1261, %v1259
    %v1302 = vpack.c.b16 %v1262, %v1260
    %v1303 = vpack.c.b16 %v1265, %v1263
    %v1304 = vpack.c.b16 %v1266, %v1264
    %v1305 = vpack.c.b16 %v1269, %v1267
    %v1306 = vpack.c.b16 %v1270, %v1268
    %v1307 = vpack.c.b16 %v1273, %v1271
    %v1308 = vpack.c.b16 %v1274, %v1272
    %v1309 = vpack.c.b16 %v1277, %v1275
    %v1310 = vpack.c.b16 %v1278, %v1276
    %1343 = vmatpush.bf16.msra.mxu0 %v1293
    %1344 = vmatpush.bf16.msra.mxu0 %v1291
    %1345 = vmatpush.bf16.msra.mxu0 %v1289
    %1346 = vmatpush.bf16.msra.mxu0 %v1287
    %1347 = vmatpush.bf16.msra.mxu0 %v1285
    %1348 = vmatpush.bf16.msra.mxu0 %v1283
    %1349 = vmatpush.bf16.msra.mxu0 %v1281
    %1350 = vmatpush.bf16.msra.mxu0 %v1279
    %1351 = vmatmul.bf16.gmra.mxu0 %v1141
    %v1352 = vpop.f32.mrf.mxu0
    %v1353 = vadd.f32 %v1179, %v1352
    %v1354 = vpop.f32.mrf.mxu0
    %1355 = vdwg.mxu0
    %1356 = vmatpush.bf16.msra.mxu0 %v1309
    %1357 = vmatpush.bf16.msra.mxu0 %v1307
    %1358 = vmatpush.bf16.msra.mxu0 %v1305
    %1359 = vmatpush.bf16.msra.mxu0 %v1303
    %1360 = vmatpush.bf16.msra.mxu0 %v1301
    %1361 = vmatpush.bf16.msra.mxu0 %v1299
    %1362 = vmatpush.bf16.msra.mxu0 %v1297
    %1363 = vmatpush.bf16.msra.mxu0 %v1295
    %1364 = vmatmul.bf16.gmra.mxu0 %v1142
    %v1365 = vpop.f32.mrf.mxu0
    %v1366 = vadd.f32 %v1353, %v1365
    %v1367 = vpop.f32.mrf.mxu0
    %1368 = vdwg.mxu0
    %1369 = vmatpush.bf16.msra.mxu0 %v1294
    %1370 = vmatpush.bf16.msra.mxu0 %v1292
    %1371 = vmatpush.bf16.msra.mxu0 %v1290
    %1372 = vmatpush.bf16.msra.mxu0 %v1288
    %1373 = vmatpush.bf16.msra.mxu0 %v1286
    %1374 = vmatpush.bf16.msra.mxu0 %v1284
    %1375 = vmatpush.bf16.msra.mxu0 %v1282
    %1376 = vmatpush.bf16.msra.mxu0 %v1280
    %1377 = vmatmul.bf16.gmra.mxu0 %v1141
    %v1378 = vpop.f32.mrf.mxu0
    %v1379 = vadd.f32 %v1180, %v1378
    %v1380 = vpop.f32.mrf.mxu0
    %1381 = vdwg.mxu0
    %1382 = vmatpush.bf16.msra.mxu0 %v1310
    %1383 = vmatpush.bf16.msra.mxu0 %v1308
    %1384 = vmatpush.bf16.msra.mxu0 %v1306
    %1385 = vmatpush.bf16.msra.mxu0 %v1304
    %1386 = vmatpush.bf16.msra.mxu0 %v1302
    %1387 = vmatpush.bf16.msra.mxu0 %v1300
    %1388 = vmatpush.bf16.msra.mxu0 %v1298
    %1389 = vmatpush.bf16.msra.mxu0 %v1296
    %1390 = vmatmul.bf16.gmra.mxu0 %v1142
    %v1391 = vpop.f32.mrf.mxu0
    %v1392 = vadd.f32 %v1379, %v1391
    %v1393 = vpop.f32.mrf.mxu0
    %1394 = vdwg.mxu0
    %1396 = vst [vmem:[#allocation1] ss:$4 sm:$0xff] %v874
    %v1397 = vld.sshfl [vmem:[#allocation1] sm:$0xff pattern:$0x73625140]
    %v1398 = vld.sshfl [vmem:[#allocation1 + $0x8] sm:$0xff pattern:$0x73625140]
    %v1401 = vpack.c.bf16 %v1397, %v1397
    %v1402 = vpack.c.bf16 %v1398, %v1398
    %s1403 = scalar_lea.vmem [#allocation2], 1280
    %v1404 = vld [vmem:[%s1403] sm:$0xff]
    %v1405 = vld [vmem:[%s1403 + $0x8] sm:$0xff]
    %v1406 = vld [vmem:[%s1403 + $0x10] sm:$0xff]
    %v1407 = vld [vmem:[%s1403 + $0x18] sm:$0xff]
    %v1408 = vld [vmem:[%s1403 + $0x20] sm:$0xff]
    %v1409 = vld [vmem:[%s1403 + $0x28] sm:$0xff]
    %v1410 = vld [vmem:[%s1403 + $0x30] sm:$0xff]
    %v1411 = vld [vmem:[%s1403 + $0x38] sm:$0xff]
    %v1412 = vld [vmem:[%s1403 + $0x40] sm:$0xff]
    %v1413 = vld [vmem:[%s1403 + $0x48] sm:$0xff]
    %v1414 = vld [vmem:[%s1403 + $0x50] sm:$0xff]
    %v1415 = vld [vmem:[%s1403 + $0x58] sm:$0xff]
    %v1416 = vld [vmem:[%s1403 + $0x60] sm:$0xff]
    %v1417 = vld [vmem:[%s1403 + $0x68] sm:$0xff]
    %v1418 = vld [vmem:[%s1403 + $0x70] sm:$0xff]
    %v1419 = vld [vmem:[%s1403 + $0x78] sm:$0xff]
    %v1420 = vld [vmem:[%s1403 + $0x80] sm:$0xff]
    %v1421 = vld [vmem:[%s1403 + $0x88] sm:$0xff]
    %v1422 = vld [vmem:[%s1403 + $0x90] sm:$0xff]
    %v1423 = vld [vmem:[%s1403 + $0x98] sm:$0xff]
    %v1424 = vld [vmem:[%s1403 + $0xa0] sm:$0xff]
    %v1425 = vld [vmem:[%s1403 + $0xa8] sm:$0xff]
    %v1426 = vld [vmem:[%s1403 + $0xb0] sm:$0xff]
    %v1427 = vld [vmem:[%s1403 + $0xb8] sm:$0xff]
    %v1428 = vld [vmem:[%s1403 + $0xc0] sm:$0xff]
    %v1429 = vld [vmem:[%s1403 + $0xc8] sm:$0xff]
    %v1430 = vld [vmem:[%s1403 + $0xd0] sm:$0xff]
    %v1431 = vld [vmem:[%s1403 + $0xd8] sm:$0xff]
    %v1432 = vld [vmem:[%s1403 + $0xe0] sm:$0xff]
    %v1433 = vld [vmem:[%s1403 + $0xe8] sm:$0xff]
    %v1434 = vld [vmem:[%s1403 + $0xf0] sm:$0xff]
    %v1435 = vld [vmem:[%s1403 + $0xf8] sm:$0xff]
    %s1436 = scalar_lea.vmem %s2, 10
    %v1437 = vld [vmem:[%s1436] sm:$0x3]
    %v1439 = vperm.slane %v1437, 0
    %v1440 = vperm.slane %v1437, 1
    %v1475 = vunpack.c.l.b16 %v1404
    %v1476 = vunpack.c.h.b16 %v1404
    %v1477 = vunpack.c.l.b16 %v1405
    %v1478 = vunpack.c.h.b16 %v1405
    %v1479 = vunpack.c.l.b16 %v1406
    %v1480 = vunpack.c.h.b16 %v1406
    %v1481 = vunpack.c.l.b16 %v1407
    %v1482 = vunpack.c.h.b16 %v1407
    %v1483 = vunpack.c.l.b16 %v1408
    %v1484 = vunpack.c.h.b16 %v1408
    %v1485 = vunpack.c.l.b16 %v1409
    %v1486 = vunpack.c.h.b16 %v1409
    %v1487 = vunpack.c.l.b16 %v1410
    %v1488 = vunpack.c.h.b16 %v1410
    %v1489 = vunpack.c.l.b16 %v1411
    %v1490 = vunpack.c.h.b16 %v1411
    %v1491 = vunpack.c.l.b16 %v1412
    %v1492 = vunpack.c.h.b16 %v1412
    %v1493 = vunpack.c.l.b16 %v1413
    %v1494 = vunpack.c.h.b16 %v1413
    %v1495 = vunpack.c.l.b16 %v1414
    %v1496 = vunpack.c.h.b16 %v1414
    %v1497 = vunpack.c.l.b16 %v1415
    %v1498 = vunpack.c.h.b16 %v1415
    %v1499 = vunpack.c.l.b16 %v1416
    %v1500 = vunpack.c.h.b16 %v1416
    %v1501 = vunpack.c.l.b16 %v1417
    %v1502 = vunpack.c.h.b16 %v1417
    %v1503 = vunpack.c.l.b16 %v1418
    %v1504 = vunpack.c.h.b16 %v1418
    %v1505 = vunpack.c.l.b16 %v1419
    %v1506 = vunpack.c.h.b16 %v1419
    %v1507 = vunpack.c.l.b16 %v1420
    %v1508 = vunpack.c.h.b16 %v1420
    %v1509 = vunpack.c.l.b16 %v1421
    %v1510 = vunpack.c.h.b16 %v1421
    %v1511 = vunpack.c.l.b16 %v1422
    %v1512 = vunpack.c.h.b16 %v1422
    %v1513 = vunpack.c.l.b16 %v1423
    %v1514 = vunpack.c.h.b16 %v1423
    %v1515 = vunpack.c.l.b16 %v1424
    %v1516 = vunpack.c.h.b16 %v1424
    %v1517 = vunpack.c.l.b16 %v1425
    %v1518 = vunpack.c.h.b16 %v1425
    %v1519 = vunpack.c.l.b16 %v1426
    %v1520 = vunpack.c.h.b16 %v1426
    %v1521 = vunpack.c.l.b16 %v1427
    %v1522 = vunpack.c.h.b16 %v1427
    %v1523 = vunpack.c.l.b16 %v1428
    %v1524 = vunpack.c.h.b16 %v1428
    %v1525 = vunpack.c.l.b16 %v1429
    %v1526 = vunpack.c.h.b16 %v1429
    %v1527 = vunpack.c.l.b16 %v1430
    %v1528 = vunpack.c.h.b16 %v1430
    %v1529 = vunpack.c.l.b16 %v1431
    %v1530 = vunpack.c.h.b16 %v1431
    %v1531 = vunpack.c.l.b16 %v1432
    %v1532 = vunpack.c.h.b16 %v1432
    %v1533 = vunpack.c.l.b16 %v1433
    %v1534 = vunpack.c.h.b16 %v1433
    %v1535 = vunpack.c.l.b16 %v1434
    %v1536 = vunpack.c.h.b16 %v1434
    %v1537 = vunpack.c.l.b16 %v1435
    %v1538 = vunpack.c.h.b16 %v1435
    %v1539 = vpack.c.b16 %v1477, %v1475
    %v1540 = vpack.c.b16 %v1478, %v1476
    %v1541 = vpack.c.b16 %v1481, %v1479
    %v1542 = vpack.c.b16 %v1482, %v1480
    %v1543 = vpack.c.b16 %v1485, %v1483
    %v1544 = vpack.c.b16 %v1486, %v1484
    %v1545 = vpack.c.b16 %v1489, %v1487
    %v1546 = vpack.c.b16 %v1490, %v1488
    %v1547 = vpack.c.b16 %v1493, %v1491
    %v1548 = vpack.c.b16 %v1494, %v1492
    %v1549 = vpack.c.b16 %v1497, %v1495
    %v1550 = vpack.c.b16 %v1498, %v1496
    %v1551 = vpack.c.b16 %v1501, %v1499
    %v1552 = vpack.c.b16 %v1502, %v1500
    %v1553 = vpack.c.b16 %v1505, %v1503
    %v1554 = vpack.c.b16 %v1506, %v1504
    %v1555 = vpack.c.b16 %v1509, %v1507
    %v1556 = vpack.c.b16 %v1510, %v1508
    %v1557 = vpack.c.b16 %v1513, %v1511
    %v1558 = vpack.c.b16 %v1514, %v1512
    %v1559 = vpack.c.b16 %v1517, %v1515
    %v1560 = vpack.c.b16 %v1518, %v1516
    %v1561 = vpack.c.b16 %v1521, %v1519
    %v1562 = vpack.c.b16 %v1522, %v1520
    %v1563 = vpack.c.b16 %v1525, %v1523
    %v1564 = vpack.c.b16 %v1526, %v1524
    %v1565 = vpack.c.b16 %v1529, %v1527
    %v1566 = vpack.c.b16 %v1530, %v1528
    %v1567 = vpack.c.b16 %v1533, %v1531
    %v1568 = vpack.c.b16 %v1534, %v1532
    %v1569 = vpack.c.b16 %v1537, %v1535
    %v1570 = vpack.c.b16 %v1538, %v1536
    %1603 = vmatpush.bf16.msra.mxu0 %v1553
    %1604 = vmatpush.bf16.msra.mxu0 %v1551
    %1605 = vmatpush.bf16.msra.mxu0 %v1549
    %1606 = vmatpush.bf16.msra.mxu0 %v1547
    %1607 = vmatpush.bf16.msra.mxu0 %v1545
    %1608 = vmatpush.bf16.msra.mxu0 %v1543
    %1609 = vmatpush.bf16.msra.mxu0 %v1541
    %1610 = vmatpush.bf16.msra.mxu0 %v1539
    %1611 = vmatmul.bf16.gmra.mxu0 %v1401
    %v1612 = vpop.f32.mrf.mxu0
    %v1613 = vadd.f32 %v1439, %v1612
    %v1614 = vpop.f32.mrf.mxu0
    %1615 = vdwg.mxu0
    %1616 = vmatpush.bf16.msra.mxu0 %v1569
    %1617 = vmatpush.bf16.msra.mxu0 %v1567
    %1618 = vmatpush.bf16.msra.mxu0 %v1565
    %1619 = vmatpush.bf16.msra.mxu0 %v1563
    %1620 = vmatpush.bf16.msra.mxu0 %v1561
    %1621 = vmatpush.bf16.msra.mxu0 %v1559
    %1622 = vmatpush.bf16.msra.mxu0 %v1557
    %1623 = vmatpush.bf16.msra.mxu0 %v1555
    %1624 = vmatmul.bf16.gmra.mxu0 %v1402
    %v1625 = vpop.f32.mrf.mxu0
    %v1626 = vadd.f32 %v1613, %v1625
    %v1627 = vpop.f32.mrf.mxu0
    %1628 = vdwg.mxu0
    %1629 = vmatpush.bf16.msra.mxu0 %v1554
    %1630 = vmatpush.bf16.msra.mxu0 %v1552
    %1631 = vmatpush.bf16.msra.mxu0 %v1550
    %1632 = vmatpush.bf16.msra.mxu0 %v1548
    %1633 = vmatpush.bf16.msra.mxu0 %v1546
    %1634 = vmatpush.bf16.msra.mxu0 %v1544
    %1635 = vmatpush.bf16.msra.mxu0 %v1542
    %1636 = vmatpush.bf16.msra.mxu0 %v1540
    %1637 = vmatmul.bf16.gmra.mxu0 %v1401
    %v1638 = vpop.f32.mrf.mxu0
    %v1639 = vadd.f32 %v1440, %v1638
    %v1640 = vpop.f32.mrf.mxu0
    %1641 = vdwg.mxu0
    %1642 = vmatpush.bf16.msra.mxu0 %v1570
    %1643 = vmatpush.bf16.msra.mxu0 %v1568
    %1644 = vmatpush.bf16.msra.mxu0 %v1566
    %1645 = vmatpush.bf16.msra.mxu0 %v1564
    %1646 = vmatpush.bf16.msra.mxu0 %v1562
    %1647 = vmatpush.bf16.msra.mxu0 %v1560
    %1648 = vmatpush.bf16.msra.mxu0 %v1558
    %1649 = vmatpush.bf16.msra.mxu0 %v1556
    %1650 = vmatmul.bf16.gmra.mxu0 %v1402
    %v1651 = vpop.f32.mrf.mxu0
    %v1652 = vadd.f32 %v1639, %v1651
    %v1653 = vpop.f32.mrf.mxu0
    %1654 = vdwg.mxu0
    %v1655 = vmax.f32 %v1106, %v1366
    %v1656 = vmax.f32 %v1132, %v1392
    %v1657 = vmax.f32 %v1655, %v1626
    %v1658 = vmax.f32 %v1656, %v1652
    %v1659 = vsub.f32 %v1106, %v1657
    %v1660 = vsub.f32 %v1132, %v1658
    %v1661 = vmul.f32 %v1659, 1.442695
    %v1662 = vpow.pop %v1661
    %v1663 = vmul.f32 %v1660, 1.442695
    %v1664 = vpow.pop %v1663
    %v1665 = vsub.f32 %v1366, %v1657
    %v1666 = vsub.f32 %v1392, %v1658
    %v1667 = vmul.f32 %v1665, 1.442695
    %v1668 = vpow.pop %v1667
    %v1669 = vmul.f32 %v1666, 1.442695
    %v1670 = vpow.pop %v1669
    %v1671 = vsub.f32 %v1626, %v1657
    %v1672 = vsub.f32 %v1652, %v1658
    %v1673 = vmul.f32 %v1671, 1.442695
    %v1674 = vpow.pop %v1673
    %v1675 = vmul.f32 %v1672, 1.442695
    %v1676 = vpow.pop %v1675
    %v1677 = vadd.f32 %v1662, %v1668
    %v1678 = vadd.f32 %v1664, %v1670
    %v1679 = vadd.f32 %v1677, %v1674
    %v1680 = vadd.f32 %v1678, %v1676
    %v1681 = vrcp.pop %v1679
    %v1682 = vrcp.pop %v1680
    %v1685 = vrot.slane %v1664, 6
    %v1686 = vsel %vm844, %v1662, %v1685
    %v1688 = vmul.f32 %v870, %v1686
    %v1691 = vrot.slane %v1670, 6
    %v1692 = vsel %vm844, %v1668, %v1691
    %v1694 = vmul.f32 %v872, %v1692
    %v1695 = vadd.f32 %v1688, %v1694
    %v1698 = vrot.slane %v1676, 6
    %v1699 = vsel %vm844, %v1674, %v1698
    %v1701 = vmul.f32 %v874, %v1699
    %v1702 = vadd.f32 %v1695, %v1701
    %v1705 = vrot.slane %v1682, 6
    %v1706 = vsel %vm844, %v1681, %v1705
    %v1708 = vmul.f32 %v1702, %v1706
    %s1709 = scalar_lea.vmem %s3, 4
    %1710 = vst [vmem:[%s1709] sm:$0xf] %v1708
    // Predicated region
    $region18: #{_freq_merging_forward.1} parent=1 // pred_check
      _
    $region19: #{_freq_merging_forward.1} parent=1 // pred_check_branch
      %1712 = sbr.rel (0) target = $region21
    $region20: #{_freq_merging_forward.1} parent=1 // pred_region
      _
    $region21: #{_freq_merging_forward.1} parent=1 // pred_fallthru
      _
    // Predicated region
    $region22: #{_freq_merging_forward.1} parent=1 // pred_check
      _
    $region23: #{_freq_merging_forward.1} parent=1 // pred_check_branch
      %1714 = sbr.rel (0) target = $region25
    $region24: #{_freq_merging_forward.1} parent=1 // pred_region
      _
    $region25: #{_freq_merging_forward.1} parent=1 // pred_fallthru
      _
    %1715 = vsyncpa [#allocation3], 1

</llo_original>
